<compile_context>
chip_gen: v6e
topology: v6e:2x2x1
jax: 0.10.0
libtpu: 0.0.40
codegen_flags: <defaults>
</compile_context>

<pallas_src>
import functools

import numpy as np
import jax
import jax.numpy as jnp
from jax.experimental import pallas as pl
from jax.experimental.pallas import tpu as pltpu

EPS = 1e-5


def cab_kernel(x_ref, mask_ref, w1_ref, g1_ref, b1_ref, w2_ref, g2_ref, b2_ref,
               caw1_ref, caw2_ref, out_ref, *, n, h, w, c, k):
    """Fused CAB forward, everything channel-major lane-dense.

    x_ref    : (C, M)        f32   activation, M = N*H*W
    mask_ref : (K*K, 1, M)   bf16  per-tap 'SAME'-padding validity masks
    w1/w2    : (C, K*K*C)    bf16  repacked 3x3 conv weights (col = tap*C + cin)
    g*/b*    : (C, 1)        f32   BN gamma / beta
    caw1     : (C//r, C)     f32   CA 1x1 conv #1
    caw2     : (C, C//r)     f32   CA 1x1 conv #2
    out_ref  : (C, M)        f32
    """
    m = n * h * w
    hw = h * w
    p = k // 2

    x_f32 = x_ref[...]

    def conv3x3(act, w_ref):
        # 3x3 'SAME' conv as ONE (C, 9C) x (9C, M) bf16 MXU matmul (f32 accumulation).
        # Taps = lane rotations along M (XLU) + precomputed border masks; per-tap slabs are
        # cast to bf16 and stacked along the sublane axis (plain vreg copies).
        rows = []
        for ky in range(k):
            for kx in range(k):
                t = ky * k + kx
                d = (ky - p) * w + (kx - p)          # flat shift of this tap along M
                if d == 0:
                    rows.append(act.astype(jnp.bfloat16))
                else:
                    shifted = pltpu.roll(act, shift=(-d) % m, axis=1)
                    rows.append(shifted.astype(jnp.bfloat16) * mask_ref[t])
        patches = jnp.concatenate(rows, axis=0)                       # (9C, M) bf16
        return jnp.dot(w_ref[...], patches,
                       preferred_element_type=jnp.float32)            # (C, M) f32

    def bn(z, g_ref, b_ref):
        # Train-mode BatchNorm2d: per-channel batch stats over M = N*H*W (lane reduction),
        # centered biased variance, eps = 1e-5.
        mu = jnp.mean(z, axis=1, keepdims=True)
        d0 = z - mu
        var = jnp.mean(d0 * d0, axis=1, keepdims=True)
        return d0 * jax.lax.rsqrt(var + EPS) * g_ref[...] + b_ref[...]

    # ---- body: Conv -> BN -> ReLU -> Conv -> BN (intermediates never leave VMEM) --------
    h1 = jnp.maximum(bn(conv3x3(x_f32, w1_ref), g1_ref, b1_ref), 0.0)
    res = bn(conv3x3(h1, w2_ref), g2_ref, b2_ref)                     # (C, M) f32

    # ---- channel attention: per-image avg/max pool, ONE fused MLP pass -------------------
    pools = []
    for i in range(n):
        pools.append(jnp.mean(res[:, i * hw:(i + 1) * hw], axis=1, keepdims=True))
    for i in range(n):
        pools.append(jnp.max(res[:, i * hw:(i + 1) * hw], axis=1, keepdims=True))
    pooled = jnp.concatenate(pools, axis=1)                           # (C, 2N) f32

    mid = jnp.maximum(jnp.dot(caw1_ref[...], pooled,
                              preferred_element_type=jnp.float32), 0.0)   # (C//r, 2N)
    du = jnp.dot(caw2_ref[...], mid, preferred_element_type=jnp.float32)  # (C, 2N)
    gate = jax.nn.sigmoid(du[:, :n] + du[:, n:])                          # (C, N)

    # ---- gate * res + residual: per-image aligned lane-dense (C, H*W) stores -------------
    for i in range(n):
        sl = slice(i * hw, (i + 1) * hw)
        out_ref[:, sl] = res[:, sl] * gate[:, i:i + 1] + x_f32[:, sl]


def _full_spec(shape):
    nd = len(shape)
    return pl.BlockSpec(shape, lambda *_: (0,) * nd)


def cab_forward(x_nchw, params, *, kernel_size=3):
    """Forward pass of CAB.  x_nchw: (N, C, H, W) float32."""
    w1, g1, b1, w2, g2, b2, caw1, caw2 = params
    k = kernel_size
    p = k // 2
    x = x_nchw.astype(jnp.float32)
    n, c, h, w = x.shape
    m = n * h * w

    # Channel-major lane-dense layout for the kernel: (C, N*H*W).
    x_cm = jnp.transpose(x, (1, 0, 2, 3)).reshape(c, m)

    # Static per-tap border masks (numpy -> compile-time constant under jit).
    yi = (np.arange(m) // w) % h
    xi = np.arange(m) % w
    mlist = []
    for ky in range(k):
        for kx in range(k):
            dy, dx = ky - p, kx - p
            mlist.append((yi + dy >= 0) & (yi + dy < h) & (xi + dx >= 0) & (xi + dx < w))
    masks = jnp.asarray(np.stack(mlist).reshape(k * k, 1, m).astype(np.float32),
                        dtype=jnp.bfloat16)

    # Advisory cost hint so XLA schedules the surrounding transposes sensibly.
    flops = 2 * (2 * m * (k * k * c) * c) + 8 * m * c
    bytes_accessed = (2 * c * m * 4 + masks.size * 2 + (w1.size + w2.size) * 2
                      + (g1.size + b1.size + g2.size + b2.size) * 4
                      + (caw1.size + caw2.size) * 4)
    cost = pl.CostEstimate(flops=flops, transcendentals=2 * n * c + 4 * c,
                           bytes_accessed=bytes_accessed)

    out_cm = pl.pallas_call(
        functools.partial(cab_kernel, n=n, h=h, w=w, c=c, k=k),
        out_shape=jax.ShapeDtypeStruct((c, m), jnp.float32),
        in_specs=[_full_spec(x_cm.shape), _full_spec(masks.shape),
                  _full_spec(w1.shape), _full_spec(g1.shape), _full_spec(b1.shape),
                  _full_spec(w2.shape), _full_spec(g2.shape), _full_spec(b2.shape),
                  _full_spec(caw1.shape), _full_spec(caw2.shape)],
        out_specs=_full_spec((c, m)),
        cost_estimate=cost,
    )(x_cm, masks, w1, g1, b1, w2, g2, b2, caw1, caw2)

    # (C, N*H*W) -> (N, C, H, W)
    return jnp.transpose(out_cm.reshape(c, n, h, w), (1, 0, 2, 3))


def ref_cab(x, w1_pt, g1, b1, w2_pt, g2, b2, ca1_pt, ca2_pt):
    """Pure-JAX NCHW reference matching the PyTorch forward (f32 everywhere)."""
    conv = lambda a, wt: jax.lax.conv_general_dilated(
        a, wt, (1, 1), 'SAME', dimension_numbers=('NCHW', 'OIHW', 'NCHW'))

    def bn(a, g, b):
        mval = jnp.mean(a, axis=(0, 2, 3), keepdims=True)
        v = jnp.mean((a - mval) ** 2, axis=(0, 2, 3), keepdims=True)
        return (a - mval) * jax.lax.rsqrt(v + EPS) * g[None, :, None, None] \
            + b[None, :, None, None]

    hh = jnp.maximum(bn(conv(x, w1_pt), g1, b1), 0.0)
    res = bn(conv(hh, w2_pt), g2, b2)
    avg = jnp.mean(res, axis=(2, 3), keepdims=True)
    mx = jnp.max(res, axis=(2, 3), keepdims=True)
    du = lambda pp: conv(jnp.maximum(conv(pp, ca1_pt), 0.0), ca2_pt)
    gate = jax.nn.sigmoid(du(avg) + du(mx))
    return res * gate + x


if __name__ == "__main__":
    # CAB(n_feat=32, kernel_size=3, reduction=4, bias=False, act=ReLU)
    N, C, H, W = 2, 32, 16, 16
    K = 3
    RED = 4
    CMID = C // RED

    key = jax.random.PRNGKey(0)
    ks = jax.random.split(key, 5)
    x = jax.random.normal(ks[0], (N, C, H, W), jnp.float32)
    # PyTorch layouts (OIHW), bias=False everywhere; fresh BatchNorm2d => gamma=1, beta=0.
    w1_pt = 0.1 * jax.random.normal(ks[1], (C, C, K, K), jnp.float32)
    w2_pt = 0.1 * jax.random.normal(ks[2], (C, C, K, K), jnp.float32)
    ca1_pt = 0.1 * jax.random.normal(ks[3], (CMID, C, 1, 1), jnp.float32)
    ca2_pt = 0.1 * jax.random.normal(ks[4], (C, CMID, 1, 1), jnp.float32)
    g1 = jnp.ones((C, 1), jnp.float32)
    b1 = jnp.zeros((C, 1), jnp.float32)
    g2 = jnp.ones((C, 1), jnp.float32)
    b2 = jnp.zeros((C, 1), jnp.float32)

    # Repack for the kernel:
    #   3x3 weights (O,I,kH,kW) -> (O, kH*kW*I) bf16, column order matches the tap stacking;
    #   1x1 CA weights -> (CMID, C) / (C, CMID) f32 (channel-major, used as LHS).
    w1 = jnp.transpose(w1_pt, (0, 2, 3, 1)).reshape(C, K * K * C).astype(jnp.bfloat16)
    w2 = jnp.transpose(w2_pt, (0, 2, 3, 1)).reshape(C, K * K * C).astype(jnp.bfloat16)
    caw1 = ca1_pt[:, :, 0, 0]            # (CMID, C)
    caw2 = ca2_pt[:, :, 0, 0]            # (C, CMID)
    params = (w1, g1, b1, w2, g2, b2, caw1, caw2)

    out = jax.jit(functools.partial(cab_forward, kernel_size=K))(x, params)
    out = jax.block_until_ready(out)

    ref = ref_cab(x, w1_pt, g1[:, 0], b1[:, 0], w2_pt, g2[:, 0], b2[:, 0], ca1_pt, ca2_pt)
    assert out.shape == x.shape and out.dtype == jnp.float32
    # bf16 MXU conv inputs (f32 accumulation) vs the pure-f32 reference => ~1e-3-scale error.
    err = float(jnp.max(jnp.abs(out - ref)))
    if not bool(jnp.allclose(out, ref, rtol=2e-2, atol=2e-2)):
        raise SystemExit(f"MISMATCH: max abs err = {err}")
    print("KERNEL_OK")
</pallas_src>

<mosaic_0001>
module attributes {stable_mosaic.version = 11 : i64} {
  func.func @cab_kernel(%arg0: memref<32x512xf32, #tpu.memory_space<vmem>>, %arg1: memref<9x1x512xbf16, #tpu.memory_space<vmem>>, %arg2: memref<32x288xbf16, #tpu.memory_space<vmem>>, %arg3: memref<32x1xf32, #tpu.memory_space<vmem>>, %arg4: memref<32x1xf32, #tpu.memory_space<vmem>>, %arg5: memref<32x288xbf16, #tpu.memory_space<vmem>>, %arg6: memref<32x1xf32, #tpu.memory_space<vmem>>, %arg7: memref<32x1xf32, #tpu.memory_space<vmem>>, %arg8: memref<8x32xf32, #tpu.memory_space<vmem>>, %arg9: memref<32x8xf32, #tpu.memory_space<vmem>>, %arg10: memref<32x512xf32, #tpu.memory_space<vmem>>) attributes {dimension_semantics = [], scalar_prefetch = 0 : i64, scratch_operands = 0 : i64, tpu.core_type = #tpu.core_type<tc>} {
    %c0 = arith.constant 0 : index
    %c0_0 = arith.constant 0 : index
    %0 = vector.load %arg0[%c0, %c0_0] : memref<32x512xf32, #tpu.memory_space<vmem>>, vector<32x512xf32>
    %c17_i32 = arith.constant 17 : i32
    %1 = tpu.dynamic_rotate %0 by %c17_i32 dim 1 : vector<32x512xf32>, i32 -> vector<32x512xf32>
    %2 = arith.truncf %1 : vector<32x512xf32> to vector<32x512xbf16>
    %c0_1 = arith.constant 0 : index
    %c0_2 = arith.constant 0 : index
    %c0_3 = arith.constant 0 : index
    %3 = vector.load %arg1[%c0_1, %c0_2, %c0_3] : memref<9x1x512xbf16, #tpu.memory_space<vmem>>, vector<1x1x512xbf16>
    %4 = vector.shape_cast %3 : vector<1x1x512xbf16> to vector<1x512xbf16>
    %5 = vector.broadcast %4 : vector<1x512xbf16> to vector<32x512xbf16>
    %6 = arith.mulf %2, %5 : vector<32x512xbf16>
    %c16_i32 = arith.constant 16 : i32
    %7 = tpu.dynamic_rotate %0 by %c16_i32 dim 1 : vector<32x512xf32>, i32 -> vector<32x512xf32>
    %8 = arith.truncf %7 : vector<32x512xf32> to vector<32x512xbf16>
    %c1 = arith.constant 1 : index
    %c0_4 = arith.constant 0 : index
    %c0_5 = arith.constant 0 : index
    %9 = vector.load %arg1[%c1, %c0_4, %c0_5] : memref<9x1x512xbf16, #tpu.memory_space<vmem>>, vector<1x1x512xbf16>
    %10 = vector.shape_cast %9 : vector<1x1x512xbf16> to vector<1x512xbf16>
    %11 = vector.broadcast %10 : vector<1x512xbf16> to vector<32x512xbf16>
    %12 = arith.mulf %8, %11 : vector<32x512xbf16>
    %c15_i32 = arith.constant 15 : i32
    %13 = tpu.dynamic_rotate %0 by %c15_i32 dim 1 : vector<32x512xf32>, i32 -> vector<32x512xf32>
    %14 = arith.truncf %13 : vector<32x512xf32> to vector<32x512xbf16>
    %c2 = arith.constant 2 : index
    %c0_6 = arith.constant 0 : index
    %c0_7 = arith.constant 0 : index
    %15 = vector.load %arg1[%c2, %c0_6, %c0_7] : memref<9x1x512xbf16, #tpu.memory_space<vmem>>, vector<1x1x512xbf16>
    %16 = vector.shape_cast %15 : vector<1x1x512xbf16> to vector<1x512xbf16>
    %17 = vector.broadcast %16 : vector<1x512xbf16> to vector<32x512xbf16>
    %18 = arith.mulf %14, %17 : vector<32x512xbf16>
    %c1_i32 = arith.constant 1 : i32
    %19 = tpu.dynamic_rotate %0 by %c1_i32 dim 1 : vector<32x512xf32>, i32 -> vector<32x512xf32>
    %20 = arith.truncf %19 : vector<32x512xf32> to vector<32x512xbf16>
    %c3 = arith.constant 3 : index
    %c0_8 = arith.constant 0 : index
    %c0_9 = arith.constant 0 : index
    %21 = vector.load %arg1[%c3, %c0_8, %c0_9] : memref<9x1x512xbf16, #tpu.memory_space<vmem>>, vector<1x1x512xbf16>
    %22 = vector.shape_cast %21 : vector<1x1x512xbf16> to vector<1x512xbf16>
    %23 = vector.broadcast %22 : vector<1x512xbf16> to vector<32x512xbf16>
    %24 = arith.mulf %20, %23 : vector<32x512xbf16>
    %25 = arith.truncf %0 : vector<32x512xf32> to vector<32x512xbf16>
    %c511_i32 = arith.constant 511 : i32
    %26 = tpu.dynamic_rotate %0 by %c511_i32 dim 1 : vector<32x512xf32>, i32 -> vector<32x512xf32>
    %27 = arith.truncf %26 : vector<32x512xf32> to vector<32x512xbf16>
    %c5 = arith.constant 5 : index
    %c0_10 = arith.constant 0 : index
    %c0_11 = arith.constant 0 : index
    %28 = vector.load %arg1[%c5, %c0_10, %c0_11] : memref<9x1x512xbf16, #tpu.memory_space<vmem>>, vector<1x1x512xbf16>
    %29 = vector.shape_cast %28 : vector<1x1x512xbf16> to vector<1x512xbf16>
    %30 = vector.broadcast %29 : vector<1x512xbf16> to vector<32x512xbf16>
    %31 = arith.mulf %27, %30 : vector<32x512xbf16>
    %c497_i32 = arith.constant 497 : i32
    %32 = tpu.dynamic_rotate %0 by %c497_i32 dim 1 : vector<32x512xf32>, i32 -> vector<32x512xf32>
    %33 = arith.truncf %32 : vector<32x512xf32> to vector<32x512xbf16>
    %c6 = arith.constant 6 : index
    %c0_12 = arith.constant 0 : index
    %c0_13 = arith.constant 0 : index
    %34 = vector.load %arg1[%c6, %c0_12, %c0_13] : memref<9x1x512xbf16, #tpu.memory_space<vmem>>, vector<1x1x512xbf16>
    %35 = vector.shape_cast %34 : vector<1x1x512xbf16> to vector<1x512xbf16>
    %36 = vector.broadcast %35 : vector<1x512xbf16> to vector<32x512xbf16>
    %37 = arith.mulf %33, %36 : vector<32x512xbf16>
    %c496_i32 = arith.constant 496 : i32
    %38 = tpu.dynamic_rotate %0 by %c496_i32 dim 1 : vector<32x512xf32>, i32 -> vector<32x512xf32>
    %39 = arith.truncf %38 : vector<32x512xf32> to vector<32x512xbf16>
    %c7 = arith.constant 7 : index
    %c0_14 = arith.constant 0 : index
    %c0_15 = arith.constant 0 : index
    %40 = vector.load %arg1[%c7, %c0_14, %c0_15] : memref<9x1x512xbf16, #tpu.memory_space<vmem>>, vector<1x1x512xbf16>
    %41 = vector.shape_cast %40 : vector<1x1x512xbf16> to vector<1x512xbf16>
    %42 = vector.broadcast %41 : vector<1x512xbf16> to vector<32x512xbf16>
    %43 = arith.mulf %39, %42 : vector<32x512xbf16>
    %c495_i32 = arith.constant 495 : i32
    %44 = tpu.dynamic_rotate %0 by %c495_i32 dim 1 : vector<32x512xf32>, i32 -> vector<32x512xf32>
    %45 = arith.truncf %44 : vector<32x512xf32> to vector<32x512xbf16>
    %c8 = arith.constant 8 : index
    %c0_16 = arith.constant 0 : index
    %c0_17 = arith.constant 0 : index
    %46 = vector.load %arg1[%c8, %c0_16, %c0_17] : memref<9x1x512xbf16, #tpu.memory_space<vmem>>, vector<1x1x512xbf16>
    %47 = vector.shape_cast %46 : vector<1x1x512xbf16> to vector<1x512xbf16>
    %48 = vector.broadcast %47 : vector<1x512xbf16> to vector<32x512xbf16>
    %49 = arith.mulf %45, %48 : vector<32x512xbf16>
    %50 = tpu.concatenate %6, %12, %18, %24, %25, %31, %37, %43, %49 in 0 : vector<32x512xbf16>, vector<32x512xbf16>, vector<32x512xbf16>, vector<32x512xbf16>, vector<32x512xbf16>, vector<32x512xbf16>, vector<32x512xbf16>, vector<32x512xbf16>, vector<32x512xbf16> -> vector<288x512xbf16>
    %c0_18 = arith.constant 0 : index
    %c0_19 = arith.constant 0 : index
    %51 = vector.load %arg2[%c0_18, %c0_19] : memref<32x288xbf16, #tpu.memory_space<vmem>>, vector<32x288xbf16>
    %cst = arith.constant dense<0.000000e+00> : vector<32x512xf32>
    %52 = tpu.matmul %51, %50, %cst {dimension_numbers = #tpu.dot_dimension_numbers<[1], [0], [0], [1], [0, 0, 1, 1], [], []>} : vector<32x288xbf16>, vector<288x512xbf16>, vector<32x512xf32> -> vector<32x512xf32>
    %cst_20 = arith.constant dense<0.000000e+00> : vector<32xf32>
    %53 = vector.multi_reduction <add>, %52, %cst_20 [1] : vector<32x512xf32> to vector<32xf32>
    %54 = vector.shape_cast %53 : vector<32xf32> to vector<32x1xf32>
    %cst_21 = arith.constant 5.120000e+02 : f32
    %55 = vector.broadcast %cst_21 : f32 to vector<32x1xf32>
    %56 = arith.divf %54, %55 : vector<32x1xf32>
    %57 = vector.broadcast %56 : vector<32x1xf32> to vector<32x512xf32>
    %58 = arith.subf %52, %57 : vector<32x512xf32>
    %59 = arith.mulf %58, %58 : vector<32x512xf32>
    %cst_22 = arith.constant dense<0.000000e+00> : vector<32xf32>
    %60 = vector.multi_reduction <add>, %59, %cst_22 [1] : vector<32x512xf32> to vector<32xf32>
    %61 = vector.shape_cast %60 : vector<32xf32> to vector<32x1xf32>
    %cst_23 = arith.constant 5.120000e+02 : f32
    %62 = vector.broadcast %cst_23 : f32 to vector<32x1xf32>
    %63 = arith.divf %61, %62 : vector<32x1xf32>
    %cst_24 = arith.constant 9.99999974E-6 : f32
    %64 = vector.broadcast %cst_24 : f32 to vector<32x1xf32>
    %65 = arith.addf %63, %64 : vector<32x1xf32>
    %66 = math.rsqrt %65 : vector<32x1xf32>
    %67 = vector.broadcast %66 : vector<32x1xf32> to vector<32x512xf32>
    %68 = arith.mulf %58, %67 : vector<32x512xf32>
    %c0_25 = arith.constant 0 : index
    %c0_26 = arith.constant 0 : index
    %69 = vector.load %arg3[%c0_25, %c0_26] : memref<32x1xf32, #tpu.memory_space<vmem>>, vector<32x1xf32>
    %70 = vector.broadcast %69 : vector<32x1xf32> to vector<32x512xf32>
    %71 = arith.mulf %68, %70 : vector<32x512xf32>
    %c0_27 = arith.constant 0 : index
    %c0_28 = arith.constant 0 : index
    %72 = vector.load %arg4[%c0_27, %c0_28] : memref<32x1xf32, #tpu.memory_space<vmem>>, vector<32x1xf32>
    %73 = vector.broadcast %72 : vector<32x1xf32> to vector<32x512xf32>
    %74 = arith.addf %71, %73 : vector<32x512xf32>
    %cst_29 = arith.constant 0.000000e+00 : f32
    %75 = vector.broadcast %cst_29 : f32 to vector<32x512xf32>
    %76 = arith.maximumf %74, %75 : vector<32x512xf32>
    %c17_i32_30 = arith.constant 17 : i32
    %77 = tpu.dynamic_rotate %76 by %c17_i32_30 dim 1 : vector<32x512xf32>, i32 -> vector<32x512xf32>
    %78 = arith.truncf %77 : vector<32x512xf32> to vector<32x512xbf16>
    %c0_31 = arith.constant 0 : index
    %c0_32 = arith.constant 0 : index
    %c0_33 = arith.constant 0 : index
    %79 = vector.load %arg1[%c0_31, %c0_32, %c0_33] : memref<9x1x512xbf16, #tpu.memory_space<vmem>>, vector<1x1x512xbf16>
    %80 = vector.shape_cast %79 : vector<1x1x512xbf16> to vector<1x512xbf16>
    %81 = vector.broadcast %80 : vector<1x512xbf16> to vector<32x512xbf16>
    %82 = arith.mulf %78, %81 : vector<32x512xbf16>
    %c16_i32_34 = arith.constant 16 : i32
    %83 = tpu.dynamic_rotate %76 by %c16_i32_34 dim 1 : vector<32x512xf32>, i32 -> vector<32x512xf32>
    %84 = arith.truncf %83 : vector<32x512xf32> to vector<32x512xbf16>
    %c1_35 = arith.constant 1 : index
    %c0_36 = arith.constant 0 : index
    %c0_37 = arith.constant 0 : index
    %85 = vector.load %arg1[%c1_35, %c0_36, %c0_37] : memref<9x1x512xbf16, #tpu.memory_space<vmem>>, vector<1x1x512xbf16>
    %86 = vector.shape_cast %85 : vector<1x1x512xbf16> to vector<1x512xbf16>
    %87 = vector.broadcast %86 : vector<1x512xbf16> to vector<32x512xbf16>
    %88 = arith.mulf %84, %87 : vector<32x512xbf16>
    %c15_i32_38 = arith.constant 15 : i32
    %89 = tpu.dynamic_rotate %76 by %c15_i32_38 dim 1 : vector<32x512xf32>, i32 -> vector<32x512xf32>
    %90 = arith.truncf %89 : vector<32x512xf32> to vector<32x512xbf16>
    %c2_39 = arith.constant 2 : index
    %c0_40 = arith.constant 0 : index
    %c0_41 = arith.constant 0 : index
    %91 = vector.load %arg1[%c2_39, %c0_40, %c0_41] : memref<9x1x512xbf16, #tpu.memory_space<vmem>>, vector<1x1x512xbf16>
    %92 = vector.shape_cast %91 : vector<1x1x512xbf16> to vector<1x512xbf16>
    %93 = vector.broadcast %92 : vector<1x512xbf16> to vector<32x512xbf16>
    %94 = arith.mulf %90, %93 : vector<32x512xbf16>
    %c1_i32_42 = arith.constant 1 : i32
    %95 = tpu.dynamic_rotate %76 by %c1_i32_42 dim 1 : vector<32x512xf32>, i32 -> vector<32x512xf32>
    %96 = arith.truncf %95 : vector<32x512xf32> to vector<32x512xbf16>
    %c3_43 = arith.constant 3 : index
    %c0_44 = arith.constant 0 : index
    %c0_45 = arith.constant 0 : index
    %97 = vector.load %arg1[%c3_43, %c0_44, %c0_45] : memref<9x1x512xbf16, #tpu.memory_space<vmem>>, vector<1x1x512xbf16>
    %98 = vector.shape_cast %97 : vector<1x1x512xbf16> to vector<1x512xbf16>
    %99 = vector.broadcast %98 : vector<1x512xbf16> to vector<32x512xbf16>
    %100 = arith.mulf %96, %99 : vector<32x512xbf16>
    %101 = arith.truncf %76 : vector<32x512xf32> to vector<32x512xbf16>
    %c511_i32_46 = arith.constant 511 : i32
    %102 = tpu.dynamic_rotate %76 by %c511_i32_46 dim 1 : vector<32x512xf32>, i32 -> vector<32x512xf32>
    %103 = arith.truncf %102 : vector<32x512xf32> to vector<32x512xbf16>
    %c5_47 = arith.constant 5 : index
    %c0_48 = arith.constant 0 : index
    %c0_49 = arith.constant 0 : index
    %104 = vector.load %arg1[%c5_47, %c0_48, %c0_49] : memref<9x1x512xbf16, #tpu.memory_space<vmem>>, vector<1x1x512xbf16>
    %105 = vector.shape_cast %104 : vector<1x1x512xbf16> to vector<1x512xbf16>
    %106 = vector.broadcast %105 : vector<1x512xbf16> to vector<32x512xbf16>
    %107 = arith.mulf %103, %106 : vector<32x512xbf16>
    %c497_i32_50 = arith.constant 497 : i32
    %108 = tpu.dynamic_rotate %76 by %c497_i32_50 dim 1 : vector<32x512xf32>, i32 -> vector<32x512xf32>
    %109 = arith.truncf %108 : vector<32x512xf32> to vector<32x512xbf16>
    %c6_51 = arith.constant 6 : index
    %c0_52 = arith.constant 0 : index
    %c0_53 = arith.constant 0 : index
    %110 = vector.load %arg1[%c6_51, %c0_52, %c0_53] : memref<9x1x512xbf16, #tpu.memory_space<vmem>>, vector<1x1x512xbf16>
    %111 = vector.shape_cast %110 : vector<1x1x512xbf16> to vector<1x512xbf16>
    %112 = vector.broadcast %111 : vector<1x512xbf16> to vector<32x512xbf16>
    %113 = arith.mulf %109, %112 : vector<32x512xbf16>
    %c496_i32_54 = arith.constant 496 : i32
    %114 = tpu.dynamic_rotate %76 by %c496_i32_54 dim 1 : vector<32x512xf32>, i32 -> vector<32x512xf32>
    %115 = arith.truncf %114 : vector<32x512xf32> to vector<32x512xbf16>
    %c7_55 = arith.constant 7 : index
    %c0_56 = arith.constant 0 : index
    %c0_57 = arith.constant 0 : index
    %116 = vector.load %arg1[%c7_55, %c0_56, %c0_57] : memref<9x1x512xbf16, #tpu.memory_space<vmem>>, vector<1x1x512xbf16>
    %117 = vector.shape_cast %116 : vector<1x1x512xbf16> to vector<1x512xbf16>
    %118 = vector.broadcast %117 : vector<1x512xbf16> to vector<32x512xbf16>
    %119 = arith.mulf %115, %118 : vector<32x512xbf16>
    %c495_i32_58 = arith.constant 495 : i32
    %120 = tpu.dynamic_rotate %76 by %c495_i32_58 dim 1 : vector<32x512xf32>, i32 -> vector<32x512xf32>
    %121 = arith.truncf %120 : vector<32x512xf32> to vector<32x512xbf16>
    %c8_59 = arith.constant 8 : index
    %c0_60 = arith.constant 0 : index
    %c0_61 = arith.constant 0 : index
    %122 = vector.load %arg1[%c8_59, %c0_60, %c0_61] : memref<9x1x512xbf16, #tpu.memory_space<vmem>>, vector<1x1x512xbf16>
    %123 = vector.shape_cast %122 : vector<1x1x512xbf16> to vector<1x512xbf16>
    %124 = vector.broadcast %123 : vector<1x512xbf16> to vector<32x512xbf16>
    %125 = arith.mulf %121, %124 : vector<32x512xbf16>
    %126 = tpu.concatenate %82, %88, %94, %100, %101, %107, %113, %119, %125 in 0 : vector<32x512xbf16>, vector<32x512xbf16>, vector<32x512xbf16>, vector<32x512xbf16>, vector<32x512xbf16>, vector<32x512xbf16>, vector<32x512xbf16>, vector<32x512xbf16>, vector<32x512xbf16> -> vector<288x512xbf16>
    %c0_62 = arith.constant 0 : index
    %c0_63 = arith.constant 0 : index
    %127 = vector.load %arg5[%c0_62, %c0_63] : memref<32x288xbf16, #tpu.memory_space<vmem>>, vector<32x288xbf16>
    %cst_64 = arith.constant dense<0.000000e+00> : vector<32x512xf32>
    %128 = tpu.matmul %127, %126, %cst_64 {dimension_numbers = #tpu.dot_dimension_numbers<[1], [0], [0], [1], [0, 0, 1, 1], [], []>} : vector<32x288xbf16>, vector<288x512xbf16>, vector<32x512xf32> -> vector<32x512xf32>
    %cst_65 = arith.constant dense<0.000000e+00> : vector<32xf32>
    %129 = vector.multi_reduction <add>, %128, %cst_65 [1] : vector<32x512xf32> to vector<32xf32>
    %130 = vector.shape_cast %129 : vector<32xf32> to vector<32x1xf32>
    %cst_66 = arith.constant 5.120000e+02 : f32
    %131 = vector.broadcast %cst_66 : f32 to vector<32x1xf32>
    %132 = arith.divf %130, %131 : vector<32x1xf32>
    %133 = vector.broadcast %132 : vector<32x1xf32> to vector<32x512xf32>
    %134 = arith.subf %128, %133 : vector<32x512xf32>
    %135 = arith.mulf %134, %134 : vector<32x512xf32>
    %cst_67 = arith.constant dense<0.000000e+00> : vector<32xf32>
    %136 = vector.multi_reduction <add>, %135, %cst_67 [1] : vector<32x512xf32> to vector<32xf32>
    %137 = vector.shape_cast %136 : vector<32xf32> to vector<32x1xf32>
    %cst_68 = arith.constant 5.120000e+02 : f32
    %138 = vector.broadcast %cst_68 : f32 to vector<32x1xf32>
    %139 = arith.divf %137, %138 : vector<32x1xf32>
    %cst_69 = arith.constant 9.99999974E-6 : f32
    %140 = vector.broadcast %cst_69 : f32 to vector<32x1xf32>
    %141 = arith.addf %139, %140 : vector<32x1xf32>
    %142 = math.rsqrt %141 : vector<32x1xf32>
    %143 = vector.broadcast %142 : vector<32x1xf32> to vector<32x512xf32>
    %144 = arith.mulf %134, %143 : vector<32x512xf32>
    %c0_70 = arith.constant 0 : index
    %c0_71 = arith.constant 0 : index
    %145 = vector.load %arg6[%c0_70, %c0_71] : memref<32x1xf32, #tpu.memory_space<vmem>>, vector<32x1xf32>
    %146 = vector.broadcast %145 : vector<32x1xf32> to vector<32x512xf32>
    %147 = arith.mulf %144, %146 : vector<32x512xf32>
    %c0_72 = arith.constant 0 : index
    %c0_73 = arith.constant 0 : index
    %148 = vector.load %arg7[%c0_72, %c0_73] : memref<32x1xf32, #tpu.memory_space<vmem>>, vector<32x1xf32>
    %149 = vector.broadcast %148 : vector<32x1xf32> to vector<32x512xf32>
    %150 = arith.addf %147, %149 : vector<32x512xf32>
    %151 = vector.extract_strided_slice %150 {offsets = [0, 0], sizes = [32, 256], strides = [1, 1]} : vector<32x512xf32> to vector<32x256xf32>
    %cst_74 = arith.constant dense<0.000000e+00> : vector<32xf32>
    %152 = vector.multi_reduction <add>, %151, %cst_74 [1] : vector<32x256xf32> to vector<32xf32>
    %153 = vector.shape_cast %152 : vector<32xf32> to vector<32x1xf32>
    %cst_75 = arith.constant 2.560000e+02 : f32
    %154 = vector.broadcast %cst_75 : f32 to vector<32x1xf32>
    %155 = arith.divf %153, %154 : vector<32x1xf32>
    %156 = vector.extract_strided_slice %150 {offsets = [0, 256], sizes = [32, 256], strides = [1, 1]} : vector<32x512xf32> to vector<32x256xf32>
    %cst_76 = arith.constant dense<0.000000e+00> : vector<32xf32>
    %157 = vector.multi_reduction <add>, %156, %cst_76 [1] : vector<32x256xf32> to vector<32xf32>
    %158 = vector.shape_cast %157 : vector<32xf32> to vector<32x1xf32>
    %cst_77 = arith.constant 2.560000e+02 : f32
    %159 = vector.broadcast %cst_77 : f32 to vector<32x1xf32>
    %160 = arith.divf %158, %159 : vector<32x1xf32>
    %161 = vector.extract_strided_slice %150 {offsets = [0, 0], sizes = [32, 256], strides = [1, 1]} : vector<32x512xf32> to vector<32x256xf32>
    %cst_78 = arith.constant dense<0xFF800000> : vector<32xf32>
    %162 = vector.multi_reduction <maximumf>, %161, %cst_78 [1] : vector<32x256xf32> to vector<32xf32>
    %163 = vector.shape_cast %162 : vector<32xf32> to vector<32x1xf32>
    %164 = vector.extract_strided_slice %150 {offsets = [0, 256], sizes = [32, 256], strides = [1, 1]} : vector<32x512xf32> to vector<32x256xf32>
    %cst_79 = arith.constant dense<0xFF800000> : vector<32xf32>
    %165 = vector.multi_reduction <maximumf>, %164, %cst_79 [1] : vector<32x256xf32> to vector<32xf32>
    %166 = vector.shape_cast %165 : vector<32xf32> to vector<32x1xf32>
    %167 = tpu.concatenate %155, %160, %163, %166 in 1 : vector<32x1xf32>, vector<32x1xf32>, vector<32x1xf32>, vector<32x1xf32> -> vector<32x4xf32>
    %c0_80 = arith.constant 0 : index
    %c0_81 = arith.constant 0 : index
    %168 = vector.load %arg8[%c0_80, %c0_81] : memref<8x32xf32, #tpu.memory_space<vmem>>, vector<8x32xf32>
    %cst_82 = arith.constant dense<0.000000e+00> : vector<8x4xf32>
    %169 = tpu.matmul %168, %167, %cst_82 {dimension_numbers = #tpu.dot_dimension_numbers<[1], [0], [0], [1], [0, 0, 1, 1], [], []>} : vector<8x32xf32>, vector<32x4xf32>, vector<8x4xf32> -> vector<8x4xf32>
    %cst_83 = arith.constant 0.000000e+00 : f32
    %170 = vector.broadcast %cst_83 : f32 to vector<8x4xf32>
    %171 = arith.maximumf %169, %170 : vector<8x4xf32>
    %c0_84 = arith.constant 0 : index
    %c0_85 = arith.constant 0 : index
    %172 = vector.load %arg9[%c0_84, %c0_85] : memref<32x8xf32, #tpu.memory_space<vmem>>, vector<32x8xf32>
    %cst_86 = arith.constant dense<0.000000e+00> : vector<32x4xf32>
    %173 = tpu.matmul %172, %171, %cst_86 {dimension_numbers = #tpu.dot_dimension_numbers<[1], [0], [0], [1], [0, 0, 1, 1], [], []>} : vector<32x8xf32>, vector<8x4xf32>, vector<32x4xf32> -> vector<32x4xf32>
    %174 = vector.extract_strided_slice %173 {offsets = [0, 0], sizes = [32, 2], strides = [1, 1]} : vector<32x4xf32> to vector<32x2xf32>
    %175 = vector.extract_strided_slice %173 {offsets = [0, 2], sizes = [32, 2], strides = [1, 1]} : vector<32x4xf32> to vector<32x2xf32>
    %176 = arith.addf %174, %175 : vector<32x2xf32>
    %177 = arith.negf %176 : vector<32x2xf32>
    %178 = math.exp %177 : vector<32x2xf32>
    %cst_87 = arith.constant 1.000000e+00 : f32
    %179 = vector.broadcast %cst_87 : f32 to vector<32x2xf32>
    %180 = arith.addf %179, %178 : vector<32x2xf32>
    %181 = arith.divf %179, %180 : vector<32x2xf32>
    %182 = vector.extract_strided_slice %150 {offsets = [0, 0], sizes = [32, 256], strides = [1, 1]} : vector<32x512xf32> to vector<32x256xf32>
    %183 = vector.extract_strided_slice %181 {offsets = [0, 0], sizes = [32, 1], strides = [1, 1]} : vector<32x2xf32> to vector<32x1xf32>
    %184 = vector.broadcast %183 : vector<32x1xf32> to vector<32x256xf32>
    %185 = arith.mulf %182, %184 : vector<32x256xf32>
    %186 = vector.extract_strided_slice %0 {offsets = [0, 0], sizes = [32, 256], strides = [1, 1]} : vector<32x512xf32> to vector<32x256xf32>
    %187 = arith.addf %185, %186 : vector<32x256xf32>
    %c0_88 = arith.constant 0 : index
    %c0_89 = arith.constant 0 : index
    %188 = vector.load %arg10[%c0_88, %c0_89] : memref<32x512xf32, #tpu.memory_space<vmem>>, vector<32x256xf32>
    tpu.vector_store %arg10[%c0_88, %c0_89], %187 {strides = array<i32>} : memref<32x512xf32, #tpu.memory_space<vmem>>, vector<32x256xf32>,
    %189 = vector.extract_strided_slice %150 {offsets = [0, 256], sizes = [32, 256], strides = [1, 1]} : vector<32x512xf32> to vector<32x256xf32>
    %190 = vector.extract_strided_slice %181 {offsets = [0, 1], sizes = [32, 1], strides = [1, 1]} : vector<32x2xf32> to vector<32x1xf32>
    %191 = vector.broadcast %190 : vector<32x1xf32> to vector<32x256xf32>
    %192 = arith.mulf %189, %191 : vector<32x256xf32>
    %193 = vector.extract_strided_slice %0 {offsets = [0, 256], sizes = [32, 256], strides = [1, 1]} : vector<32x512xf32> to vector<32x256xf32>
    %194 = arith.addf %192, %193 : vector<32x256xf32>
    %c0_90 = arith.constant 0 : index
    %c256 = arith.constant 256 : index
    %195 = vector.load %arg10[%c0_90, %c256] : memref<32x512xf32, #tpu.memory_space<vmem>>, vector<32x256xf32>
    tpu.vector_store %arg10[%c0_90, %c256], %194 {strides = array<i32>} : memref<32x512xf32, #tpu.memory_space<vmem>>, vector<32x256xf32>,
    return
  }
}

</mosaic_0001>

<llo_original>
// kernel: cab_forward.1
$region0: #{cab_forward.1}
  #allocation0 [shape = 'u32[]', space=smem, size = 0x4, offset = 0x4, fixed_abs, tag = 'smem constant byte address 0x4 - core index']
  #allocation1 [shape = 'u32[144,128]{1,0:T(1,128)}', space=vmem, size = 0x12000, scoped, tag = 'internal scratch']
  %s0 = inlined_call_operand.vmem [shape: f32[32,512], index: 0, kind: input, shape index: {}]
  %s1 = inlined_call_operand.vmem [shape: bf16[9,1,512], index: 1, kind: input, shape index: {}]
  %s2 = inlined_call_operand.vmem [shape: bf16[32,288], index: 2, kind: input, shape index: {}]
  %s3 = inlined_call_operand.vmem [shape: f32[32,1], index: 3, kind: input, shape index: {}]
  %s4 = inlined_call_operand.vmem [shape: f32[32,1], index: 4, kind: input, shape index: {}]
  %s5 = inlined_call_operand.vmem [shape: bf16[32,288], index: 5, kind: input, shape index: {}]
  %s6 = inlined_call_operand.vmem [shape: f32[32,1], index: 6, kind: input, shape index: {}]
  %s7 = inlined_call_operand.vmem [shape: f32[32,1], index: 7, kind: input, shape index: {}]
  %s8 = inlined_call_operand.vmem [shape: f32[8,32], index: 8, kind: input, shape index: {}]
  %s9 = inlined_call_operand.vmem [shape: f32[32,8], index: 9, kind: input, shape index: {}]
  %s10 = inlined_call_operand.vmem [shape: f32[32,512], index: 10, kind: output, shape index: {}]
  %s11 = sld [smem:[#allocation0]]
  $region50: #{cab_forward.1} parent=0
    _
  %s13 = ssub.s32 1, %s11
  %s14 = scalar_select 0, %s13, %s11
  // Predicated region
  $region2: #{cab_forward.1} parent=0 // pred_check
    _
  $region3: #{cab_forward.1} parent=0 // pred_check_branch
    %16 = sbr.rel (0) target = $region5
  $region4: #{cab_forward.1} parent=0 // pred_region
    _
  $region5: #{cab_forward.1} parent=0 // pred_fallthru
    _
  // Predicated region
  $region6: #{cab_forward.1} parent=0 // pred_check
    _
  $region7: #{cab_forward.1} parent=0 // pred_check_branch
    %18 = sbr.rel (0) target = $region9
  $region8: #{cab_forward.1} parent=0 // pred_region
    _
  $region9: #{cab_forward.1} parent=0 // pred_fallthru
    _
  // Predicated region
  $region10: #{cab_forward.1} parent=0 // pred_check
    _
  $region11: #{cab_forward.1} parent=0 // pred_check_branch
    %20 = sbr.rel (0) target = $region13
  $region12: #{cab_forward.1} parent=0 // pred_region
    _
  $region13: #{cab_forward.1} parent=0 // pred_fallthru
    _
  // Predicated region
  $region14: #{cab_forward.1} parent=0 // pred_check
    _
  $region15: #{cab_forward.1} parent=0 // pred_check_branch
    %22 = sbr.rel (0) target = $region17
  $region16: #{cab_forward.1} parent=0 // pred_region
    _
  $region17: #{cab_forward.1} parent=0 // pred_fallthru
    _
  // Predicated region
  $region18: #{cab_forward.1} parent=0 // pred_check
    _
  $region19: #{cab_forward.1} parent=0 // pred_check_branch
    %24 = sbr.rel (0) target = $region21
  $region20: #{cab_forward.1} parent=0 // pred_region
    _
  $region21: #{cab_forward.1} parent=0 // pred_fallthru
    _
  // Predicated region
  $region22: #{cab_forward.1} parent=0 // pred_check
    _
  $region23: #{cab_forward.1} parent=0 // pred_check_branch
    %26 = sbr.rel (0) target = $region25
  $region24: #{cab_forward.1} parent=0 // pred_region
    _
  $region25: #{cab_forward.1} parent=0 // pred_fallthru
    _
  // Predicated region
  $region26: #{cab_forward.1} parent=0 // pred_check
    _
  $region27: #{cab_forward.1} parent=0 // pred_check_branch
    %28 = sbr.rel (0) target = $region29
  $region28: #{cab_forward.1} parent=0 // pred_region
    _
  $region29: #{cab_forward.1} parent=0 // pred_fallthru
    _
  // Predicated region
  $region30: #{cab_forward.1} parent=0 // pred_check
    _
  $region31: #{cab_forward.1} parent=0 // pred_check_branch
    %30 = sbr.rel (0) target = $region33
  $region32: #{cab_forward.1} parent=0 // pred_region
    _
  $region33: #{cab_forward.1} parent=0 // pred_fallthru
    _
  // Predicated region
  $region34: #{cab_forward.1} parent=0 // pred_check
    _
  $region35: #{cab_forward.1} parent=0 // pred_check_branch
    %32 = sbr.rel (0) target = $region37
  $region36: #{cab_forward.1} parent=0 // pred_region
    _
  $region37: #{cab_forward.1} parent=0 // pred_fallthru
    _
  // Predicated region
  $region38: #{cab_forward.1} parent=0 // pred_check
    _
  $region39: #{cab_forward.1} parent=0 // pred_check_branch
    %34 = sbr.rel (0) target = $region41
  $region40: #{cab_forward.1} parent=0 // pred_region
    _
  $region41: #{cab_forward.1} parent=0 // pred_fallthru
    _
  %v36 = vld [vmem:[%s0] sm:$0xff]
  %v37 = vld [vmem:[%s0 + $0x8] sm:$0xff]
  %v38 = vld [vmem:[%s0 + $0x10] sm:$0xff]
  %v39 = vld [vmem:[%s0 + $0x18] sm:$0xff]
  %v40 = vld [vmem:[%s0 + $0x20] sm:$0xff]
  %v41 = vld [vmem:[%s0 + $0x28] sm:$0xff]
  %v42 = vld [vmem:[%s0 + $0x30] sm:$0xff]
  %v43 = vld [vmem:[%s0 + $0x38] sm:$0xff]
  %v44 = vld [vmem:[%s0 + $0x40] sm:$0xff]
  %v45 = vld [vmem:[%s0 + $0x48] sm:$0xff]
  %v46 = vld [vmem:[%s0 + $0x50] sm:$0xff]
  %v47 = vld [vmem:[%s0 + $0x58] sm:$0xff]
  %v48 = vld [vmem:[%s0 + $0x60] sm:$0xff]
  %v49 = vld [vmem:[%s0 + $0x68] sm:$0xff]
  %v50 = vld [vmem:[%s0 + $0x70] sm:$0xff]
  %v51 = vld [vmem:[%s0 + $0x78] sm:$0xff]
  %52 = vrot.lane.b32.xlu0 %v36, 17
  %v53 = vpop.permute.xlu0 %52
  %54 = vrot.lane.b32.xlu0 %v40, 17
  %v55 = vpop.permute.xlu0 %54
  %56 = vrot.lane.b32.xlu0 %v44, 17
  %v57 = vpop.permute.xlu0 %56
  %58 = vrot.lane.b32.xlu0 %v48, 17
  %v59 = vpop.permute.xlu0 %58
  %60 = vrot.lane.b32.xlu0 %v37, 17
  %v61 = vpop.permute.xlu0 %60
  %62 = vrot.lane.b32.xlu0 %v41, 17
  %v63 = vpop.permute.xlu0 %62
  %64 = vrot.lane.b32.xlu0 %v45, 17
  %v65 = vpop.permute.xlu0 %64
  %66 = vrot.lane.b32.xlu0 %v49, 17
  %v67 = vpop.permute.xlu0 %66
  %68 = vrot.lane.b32.xlu0 %v38, 17
  %v69 = vpop.permute.xlu0 %68
  %70 = vrot.lane.b32.xlu0 %v42, 17
  %v71 = vpop.permute.xlu0 %70
  %72 = vrot.lane.b32.xlu0 %v46, 17
  %v73 = vpop.permute.xlu0 %72
  %74 = vrot.lane.b32.xlu0 %v50, 17
  %v75 = vpop.permute.xlu0 %74
  %76 = vrot.lane.b32.xlu0 %v39, 17
  %v77 = vpop.permute.xlu0 %76
  %78 = vrot.lane.b32.xlu0 %v43, 17
  %v79 = vpop.permute.xlu0 %78
  %80 = vrot.lane.b32.xlu0 %v47, 17
  %v81 = vpop.permute.xlu0 %80
  %82 = vrot.lane.b32.xlu0 %v51, 17
  %v83 = vpop.permute.xlu0 %82
  %v84 = vlaneseq
  %v85 = vand.u32 %v84, 127
  %vm86 = vcmp.lt.s32.totalorder %v85, 17
  %v87 = vsel %vm86, %v69, %v77
  %v88 = vsel %vm86, %v71, %v79
  %v89 = vsel %vm86, %v73, %v81
  %v90 = vsel %vm86, %v75, %v83
  %v91 = vsel %vm86, %v61, %v69
  %v92 = vsel %vm86, %v63, %v71
  %v93 = vsel %vm86, %v65, %v73
  %v94 = vsel %vm86, %v67, %v75
  %v95 = vsel %vm86, %v53, %v61
  %v96 = vsel %vm86, %v55, %v63
  %v97 = vsel %vm86, %v57, %v65
  %v98 = vsel %vm86, %v59, %v67
  %v99 = vsel %vm86, %v77, %v53
  %v100 = vsel %vm86, %v79, %v55
  %v101 = vsel %vm86, %v81, %v57
  %v102 = vsel %vm86, %v83, %v59
  %v103 = vpack.c.bf16 %v100, %v99
  %v104 = vpack.c.bf16 %v96, %v95
  %v105 = vpack.c.bf16 %v92, %v91
  %v106 = vpack.c.bf16 %v88, %v87
  %v107 = vpack.c.bf16 %v102, %v101
  %v108 = vpack.c.bf16 %v98, %v97
  %v109 = vpack.c.bf16 %v94, %v93
  %v110 = vpack.c.bf16 %v90, %v89
  %v111 = vld [vmem:[%s1] sm:$0xf]
  %v114 = vunpack.c.l.s4 1966171168
  %v115 = vunpack.c.0.s8 %v114
  %v116 = vlaneseq
  %v117 = vshrl.u32 %v116, 7
  %v118 = vsub.s32 %v115, %v117
  %v119 = vrot.slane %v111, %v118
  %v120 = vcombine.high %v119, %v119
  %v122 = vunpack.c.l.s4 1966171168
  %v123 = vunpack.c.0.s8 %v122
  %v124 = vlaneseq
  %v125 = vshrl.u32 %v124, 7
  %v126 = vsub.s32 %v123, %v125
  %v127 = vrot.slane %v119, %v126
  %v129 = vunpack.c.l.s4 1966171168
  %v130 = vunpack.c.0.s8 %v129
  %v131 = vlaneseq
  %v132 = vshrl.u32 %v131, 7
  %v133 = vsub.s32 %v130, %v132
  %v134 = vrot.slane %v120, %v133
  %v135 = vcombine.high %v127, %v127
  %v136 = vcombine.high %v134, %v134
  %v138 = vpack.i.b16 %v127, %v127
  %v140 = vlaneseq
  %v141 = vshrl.u32 %v140, 7
  %v142 = vsub.s32 0, %v141
  %v143 = vrot.slane %v138, %v142
  %v145 = vpack.i.b16 %v134, %v134
  %v147 = vlaneseq
  %v148 = vshrl.u32 %v147, 7
  %v149 = vsub.s32 0, %v148
  %v150 = vrot.slane %v145, %v149
  %v152 = vpack.i.b16 %v135, %v135
  %v154 = vlaneseq
  %v155 = vshrl.u32 %v154, 7
  %v156 = vsub.s32 0, %v155
  %v157 = vrot.slane %v152, %v156
  %v159 = vpack.i.b16 %v136, %v136
  %v161 = vlaneseq
  %v162 = vshrl.u32 %v161, 7
  %v163 = vsub.s32 0, %v162
  %v164 = vrot.slane %v159, %v163
  %v165 = vmul.bf16 %v103, %v143
  %v166 = vmul.bf16 %v104, %v150
  %v167 = vmul.bf16 %v105, %v157
  %v168 = vmul.bf16 %v106, %v164
  %v169 = vmul.bf16 %v107, %v143
  %v170 = vmul.bf16 %v108, %v150
  %v171 = vmul.bf16 %v109, %v157
  %v172 = vmul.bf16 %v110, %v164
  %173 = vrot.lane.b32.xlu0 %v36, 16
  %v174 = vpop.permute.xlu0 %173
  %175 = vrot.lane.b32.xlu0 %v40, 16
  %v176 = vpop.permute.xlu0 %175
  %177 = vrot.lane.b32.xlu0 %v44, 16
  %v178 = vpop.permute.xlu0 %177
  %179 = vrot.lane.b32.xlu0 %v48, 16
  %v180 = vpop.permute.xlu0 %179
  %181 = vrot.lane.b32.xlu0 %v37, 16
  %v182 = vpop.permute.xlu0 %181
  %183 = vrot.lane.b32.xlu0 %v41, 16
  %v184 = vpop.permute.xlu0 %183
  %185 = vrot.lane.b32.xlu0 %v45, 16
  %v186 = vpop.permute.xlu0 %185
  %187 = vrot.lane.b32.xlu0 %v49, 16
  %v188 = vpop.permute.xlu0 %187
  %189 = vrot.lane.b32.xlu0 %v38, 16
  %v190 = vpop.permute.xlu0 %189
  %191 = vrot.lane.b32.xlu0 %v42, 16
  %v192 = vpop.permute.xlu0 %191
  %193 = vrot.lane.b32.xlu0 %v46, 16
  %v194 = vpop.permute.xlu0 %193
  %195 = vrot.lane.b32.xlu0 %v50, 16
  %v196 = vpop.permute.xlu0 %195
  %197 = vrot.lane.b32.xlu0 %v39, 16
  %v198 = vpop.permute.xlu0 %197
  %199 = vrot.lane.b32.xlu0 %v43, 16
  %v200 = vpop.permute.xlu0 %199
  %201 = vrot.lane.b32.xlu0 %v47, 16
  %v202 = vpop.permute.xlu0 %201
  %203 = vrot.lane.b32.xlu0 %v51, 16
  %v204 = vpop.permute.xlu0 %203
  %vm205 = vcmp.lt.s32.totalorder %v85, 16
  %v206 = vsel %vm205, %v190, %v198
  %v207 = vsel %vm205, %v192, %v200
  %v208 = vsel %vm205, %v194, %v202
  %v209 = vsel %vm205, %v196, %v204
  %v210 = vsel %vm205, %v182, %v190
  %v211 = vsel %vm205, %v184, %v192
  %v212 = vsel %vm205, %v186, %v194
  %v213 = vsel %vm205, %v188, %v196
  %v214 = vsel %vm205, %v174, %v182
  %v215 = vsel %vm205, %v176, %v184
  %v216 = vsel %vm205, %v178, %v186
  %v217 = vsel %vm205, %v180, %v188
  %v218 = vsel %vm205, %v198, %v174
  %v219 = vsel %vm205, %v200, %v176
  %v220 = vsel %vm205, %v202, %v178
  %v221 = vsel %vm205, %v204, %v180
  %v222 = vpack.c.bf16 %v219, %v218
  %v223 = vpack.c.bf16 %v215, %v214
  %v224 = vpack.c.bf16 %v211, %v210
  %v225 = vpack.c.bf16 %v207, %v206
  %v226 = vpack.c.bf16 %v221, %v220
  %v227 = vpack.c.bf16 %v217, %v216
  %v228 = vpack.c.bf16 %v213, %v212
  %v229 = vpack.c.bf16 %v209, %v208
  %s230 = scalar_lea.vmem %s1, 4
  %v231 = vld [vmem:[%s230] sm:$0xf]
  %v234 = vunpack.c.l.s4 1966171168
  %v235 = vunpack.c.0.s8 %v234
  %v236 = vlaneseq
  %v237 = vshrl.u32 %v236, 7
  %v238 = vsub.s32 %v235, %v237
  %v239 = vrot.slane %v231, %v238
  %v240 = vcombine.high %v239, %v239
  %v242 = vunpack.c.l.s4 1966171168
  %v243 = vunpack.c.0.s8 %v242
  %v244 = vlaneseq
  %v245 = vshrl.u32 %v244, 7
  %v246 = vsub.s32 %v243, %v245
  %v247 = vrot.slane %v239, %v246
  %v249 = vunpack.c.l.s4 1966171168
  %v250 = vunpack.c.0.s8 %v249
  %v251 = vlaneseq
  %v252 = vshrl.u32 %v251, 7
  %v253 = vsub.s32 %v250, %v252
  %v254 = vrot.slane %v240, %v253
  %v255 = vcombine.high %v247, %v247
  %v256 = vcombine.high %v254, %v254
  %v258 = vpack.i.b16 %v247, %v247
  %v260 = vlaneseq
  %v261 = vshrl.u32 %v260, 7
  %v262 = vsub.s32 0, %v261
  %v263 = vrot.slane %v258, %v262
  %v265 = vpack.i.b16 %v254, %v254
  %v267 = vlaneseq
  %v268 = vshrl.u32 %v267, 7
  %v269 = vsub.s32 0, %v268
  %v270 = vrot.slane %v265, %v269
  %v272 = vpack.i.b16 %v255, %v255
  %v274 = vlaneseq
  %v275 = vshrl.u32 %v274, 7
  %v276 = vsub.s32 0, %v275
  %v277 = vrot.slane %v272, %v276
  %v279 = vpack.i.b16 %v256, %v256
  %v281 = vlaneseq
  %v282 = vshrl.u32 %v281, 7
  %v283 = vsub.s32 0, %v282
  %v284 = vrot.slane %v279, %v283
  %v285 = vmul.bf16 %v222, %v263
  %v286 = vmul.bf16 %v223, %v270
  %v287 = vmul.bf16 %v224, %v277
  %v288 = vmul.bf16 %v225, %v284
  %v289 = vmul.bf16 %v226, %v263
  %v290 = vmul.bf16 %v227, %v270
  %v291 = vmul.bf16 %v228, %v277
  %v292 = vmul.bf16 %v229, %v284
  %293 = vrot.lane.b32.xlu0 %v36, 15
  %v294 = vpop.permute.xlu0 %293
  %295 = vrot.lane.b32.xlu0 %v40, 15
  %v296 = vpop.permute.xlu0 %295
  %297 = vrot.lane.b32.xlu0 %v44, 15
  %v298 = vpop.permute.xlu0 %297
  %299 = vrot.lane.b32.xlu0 %v48, 15
  %v300 = vpop.permute.xlu0 %299
  %301 = vrot.lane.b32.xlu0 %v37, 15
  %v302 = vpop.permute.xlu0 %301
  %303 = vrot.lane.b32.xlu0 %v41, 15
  %v304 = vpop.permute.xlu0 %303
  %305 = vrot.lane.b32.xlu0 %v45, 15
  %v306 = vpop.permute.xlu0 %305
  %307 = vrot.lane.b32.xlu0 %v49, 15
  %v308 = vpop.permute.xlu0 %307
  %309 = vrot.lane.b32.xlu0 %v38, 15
  %v310 = vpop.permute.xlu0 %309
  %311 = vrot.lane.b32.xlu0 %v42, 15
  %v312 = vpop.permute.xlu0 %311
  %313 = vrot.lane.b32.xlu0 %v46, 15
  %v314 = vpop.permute.xlu0 %313
  %315 = vrot.lane.b32.xlu0 %v50, 15
  %v316 = vpop.permute.xlu0 %315
  %317 = vrot.lane.b32.xlu0 %v39, 15
  %v318 = vpop.permute.xlu0 %317
  %319 = vrot.lane.b32.xlu0 %v43, 15
  %v320 = vpop.permute.xlu0 %319
  %321 = vrot.lane.b32.xlu0 %v47, 15
  %v322 = vpop.permute.xlu0 %321
  %323 = vrot.lane.b32.xlu0 %v51, 15
  %v324 = vpop.permute.xlu0 %323
  %vm325 = vcmp.lt.s32.totalorder %v85, 15
  %v326 = vsel %vm325, %v310, %v318
  %v327 = vsel %vm325, %v312, %v320
  %v328 = vsel %vm325, %v314, %v322
  %v329 = vsel %vm325, %v316, %v324
  %v330 = vsel %vm325, %v302, %v310
  %v331 = vsel %vm325, %v304, %v312
  %v332 = vsel %vm325, %v306, %v314
  %v333 = vsel %vm325, %v308, %v316
  %v334 = vsel %vm325, %v294, %v302
  %v335 = vsel %vm325, %v296, %v304
  %v336 = vsel %vm325, %v298, %v306
  %v337 = vsel %vm325, %v300, %v308
  %v338 = vsel %vm325, %v318, %v294
  %v339 = vsel %vm325, %v320, %v296
  %v340 = vsel %vm325, %v322, %v298
  %v341 = vsel %vm325, %v324, %v300
  %v342 = vpack.c.bf16 %v339, %v338
  %v343 = vpack.c.bf16 %v335, %v334
  %v344 = vpack.c.bf16 %v331, %v330
  %v345 = vpack.c.bf16 %v327, %v326
  %v346 = vpack.c.bf16 %v341, %v340
  %v347 = vpack.c.bf16 %v337, %v336
  %v348 = vpack.c.bf16 %v333, %v332
  %v349 = vpack.c.bf16 %v329, %v328
  %s350 = scalar_lea.vmem %s1, 8
  %v351 = vld [vmem:[%s350] sm:$0xf]
  %v354 = vunpack.c.l.s4 1966171168
  %v355 = vunpack.c.0.s8 %v354
  %v356 = vlaneseq
  %v357 = vshrl.u32 %v356, 7
  %v358 = vsub.s32 %v355, %v357
  %v359 = vrot.slane %v351, %v358
  %v360 = vcombine.high %v359, %v359
  %v362 = vunpack.c.l.s4 1966171168
  %v363 = vunpack.c.0.s8 %v362
  %v364 = vlaneseq
  %v365 = vshrl.u32 %v364, 7
  %v366 = vsub.s32 %v363, %v365
  %v367 = vrot.slane %v359, %v366
  %v369 = vunpack.c.l.s4 1966171168
  %v370 = vunpack.c.0.s8 %v369
  %v371 = vlaneseq
  %v372 = vshrl.u32 %v371, 7
  %v373 = vsub.s32 %v370, %v372
  %v374 = vrot.slane %v360, %v373
  %v375 = vcombine.high %v367, %v367
  %v376 = vcombine.high %v374, %v374
  %v378 = vpack.i.b16 %v367, %v367
  %v380 = vlaneseq
  %v381 = vshrl.u32 %v380, 7
  %v382 = vsub.s32 0, %v381
  %v383 = vrot.slane %v378, %v382
  %v385 = vpack.i.b16 %v374, %v374
  %v387 = vlaneseq
  %v388 = vshrl.u32 %v387, 7
  %v389 = vsub.s32 0, %v388
  %v390 = vrot.slane %v385, %v389
  %v392 = vpack.i.b16 %v375, %v375
  %v394 = vlaneseq
  %v395 = vshrl.u32 %v394, 7
  %v396 = vsub.s32 0, %v395
  %v397 = vrot.slane %v392, %v396
  %v399 = vpack.i.b16 %v376, %v376
  %v401 = vlaneseq
  %v402 = vshrl.u32 %v401, 7
  %v403 = vsub.s32 0, %v402
  %v404 = vrot.slane %v399, %v403
  %v405 = vmul.bf16 %v342, %v383
  %v406 = vmul.bf16 %v343, %v390
  %v407 = vmul.bf16 %v344, %v397
  %v408 = vmul.bf16 %v345, %v404
  %v409 = vmul.bf16 %v346, %v383
  %v410 = vmul.bf16 %v347, %v390
  %v411 = vmul.bf16 %v348, %v397
  %v412 = vmul.bf16 %v349, %v404
  %413 = vrot.lane.b32.xlu0 %v36, 1
  %v414 = vpop.permute.xlu0 %413
  %415 = vrot.lane.b32.xlu0 %v40, 1
  %v416 = vpop.permute.xlu0 %415
  %417 = vrot.lane.b32.xlu0 %v44, 1
  %v418 = vpop.permute.xlu0 %417
  %419 = vrot.lane.b32.xlu0 %v48, 1
  %v420 = vpop.permute.xlu0 %419
  %421 = vrot.lane.b32.xlu0 %v37, 1
  %v422 = vpop.permute.xlu0 %421
  %423 = vrot.lane.b32.xlu0 %v41, 1
  %v424 = vpop.permute.xlu0 %423
  %425 = vrot.lane.b32.xlu0 %v45, 1
  %v426 = vpop.permute.xlu0 %425
  %427 = vrot.lane.b32.xlu0 %v49, 1
  %v428 = vpop.permute.xlu0 %427
  %429 = vrot.lane.b32.xlu0 %v38, 1
  %v430 = vpop.permute.xlu0 %429
  %431 = vrot.lane.b32.xlu0 %v42, 1
  %v432 = vpop.permute.xlu0 %431
  %433 = vrot.lane.b32.xlu0 %v46, 1
  %v434 = vpop.permute.xlu0 %433
  %435 = vrot.lane.b32.xlu0 %v50, 1
  %v436 = vpop.permute.xlu0 %435
  %437 = vrot.lane.b32.xlu0 %v39, 1
  %v438 = vpop.permute.xlu0 %437
  %439 = vrot.lane.b32.xlu0 %v43, 1
  %v440 = vpop.permute.xlu0 %439
  %441 = vrot.lane.b32.xlu0 %v47, 1
  %v442 = vpop.permute.xlu0 %441
  %443 = vrot.lane.b32.xlu0 %v51, 1
  %v444 = vpop.permute.xlu0 %443
  %vm445 = vcmp.lt.s32.totalorder %v85, 1
  %v446 = vsel %vm445, %v430, %v438
  %v447 = vsel %vm445, %v432, %v440
  %v448 = vsel %vm445, %v434, %v442
  %v449 = vsel %vm445, %v436, %v444
  %v450 = vsel %vm445, %v422, %v430
  %v451 = vsel %vm445, %v424, %v432
  %v452 = vsel %vm445, %v426, %v434
  %v453 = vsel %vm445, %v428, %v436
  %v454 = vsel %vm445, %v414, %v422
  %v455 = vsel %vm445, %v416, %v424
  %v456 = vsel %vm445, %v418, %v426
  %v457 = vsel %vm445, %v420, %v428
  %v458 = vsel %vm445, %v438, %v414
  %v459 = vsel %vm445, %v440, %v416
  %v460 = vsel %vm445, %v442, %v418
  %v461 = vsel %vm445, %v444, %v420
  %v462 = vpack.c.bf16 %v459, %v458
  %v463 = vpack.c.bf16 %v455, %v454
  %v464 = vpack.c.bf16 %v451, %v450
  %v465 = vpack.c.bf16 %v447, %v446
  %v466 = vpack.c.bf16 %v461, %v460
  %v467 = vpack.c.bf16 %v457, %v456
  %v468 = vpack.c.bf16 %v453, %v452
  %v469 = vpack.c.bf16 %v449, %v448
  %s470 = scalar_lea.vmem %s1, 12
  %v471 = vld [vmem:[%s470] sm:$0xf]
  %v474 = vunpack.c.l.s4 1966171168
  %v475 = vunpack.c.0.s8 %v474
  %v476 = vlaneseq
  %v477 = vshrl.u32 %v476, 7
  %v478 = vsub.s32 %v475, %v477
  %v479 = vrot.slane %v471, %v478
  %v480 = vcombine.high %v479, %v479
  %v482 = vunpack.c.l.s4 1966171168
  %v483 = vunpack.c.0.s8 %v482
  %v484 = vlaneseq
  %v485 = vshrl.u32 %v484, 7
  %v486 = vsub.s32 %v483, %v485
  %v487 = vrot.slane %v479, %v486
  %v489 = vunpack.c.l.s4 1966171168
  %v490 = vunpack.c.0.s8 %v489
  %v491 = vlaneseq
  %v492 = vshrl.u32 %v491, 7
  %v493 = vsub.s32 %v490, %v492
  %v494 = vrot.slane %v480, %v493
  %v495 = vcombine.high %v487, %v487
  %v496 = vcombine.high %v494, %v494
  %v498 = vpack.i.b16 %v487, %v487
  %v500 = vlaneseq
  %v501 = vshrl.u32 %v500, 7
  %v502 = vsub.s32 0, %v501
  %v503 = vrot.slane %v498, %v502
  %v505 = vpack.i.b16 %v494, %v494
  %v507 = vlaneseq
  %v508 = vshrl.u32 %v507, 7
  %v509 = vsub.s32 0, %v508
  %v510 = vrot.slane %v505, %v509
  %v512 = vpack.i.b16 %v495, %v495
  %v514 = vlaneseq
  %v515 = vshrl.u32 %v514, 7
  %v516 = vsub.s32 0, %v515
  %v517 = vrot.slane %v512, %v516
  %v519 = vpack.i.b16 %v496, %v496
  %v521 = vlaneseq
  %v522 = vshrl.u32 %v521, 7
  %v523 = vsub.s32 0, %v522
  %v524 = vrot.slane %v519, %v523
  %v525 = vmul.bf16 %v462, %v503
  %v526 = vmul.bf16 %v463, %v510
  %v527 = vmul.bf16 %v464, %v517
  %v528 = vmul.bf16 %v465, %v524
  %v529 = vmul.bf16 %v466, %v503
  %v530 = vmul.bf16 %v467, %v510
  %v531 = vmul.bf16 %v468, %v517
  %v532 = vmul.bf16 %v469, %v524
  %v533 = vpack.c.bf16 %v40, %v36
  %v534 = vpack.c.bf16 %v41, %v37
  %v535 = vpack.c.bf16 %v42, %v38
  %v536 = vpack.c.bf16 %v43, %v39
  %v537 = vpack.c.bf16 %v48, %v44
  %v538 = vpack.c.bf16 %v49, %v45
  %v539 = vpack.c.bf16 %v50, %v46
  %v540 = vpack.c.bf16 %v51, %v47
  %541 = vrot.lane.b32.xlu0 %v36, 127
  %v542 = vpop.permute.xlu0 %541
  %543 = vrot.lane.b32.xlu0 %v40, 127
  %v544 = vpop.permute.xlu0 %543
  %545 = vrot.lane.b32.xlu0 %v44, 127
  %v546 = vpop.permute.xlu0 %545
  %547 = vrot.lane.b32.xlu0 %v48, 127
  %v548 = vpop.permute.xlu0 %547
  %549 = vrot.lane.b32.xlu0 %v37, 127
  %v550 = vpop.permute.xlu0 %549
  %551 = vrot.lane.b32.xlu0 %v41, 127
  %v552 = vpop.permute.xlu0 %551
  %553 = vrot.lane.b32.xlu0 %v45, 127
  %v554 = vpop.permute.xlu0 %553
  %555 = vrot.lane.b32.xlu0 %v49, 127
  %v556 = vpop.permute.xlu0 %555
  %557 = vrot.lane.b32.xlu0 %v38, 127
  %v558 = vpop.permute.xlu0 %557
  %559 = vrot.lane.b32.xlu0 %v42, 127
  %v560 = vpop.permute.xlu0 %559
  %561 = vrot.lane.b32.xlu0 %v46, 127
  %v562 = vpop.permute.xlu0 %561
  %563 = vrot.lane.b32.xlu0 %v50, 127
  %v564 = vpop.permute.xlu0 %563
  %565 = vrot.lane.b32.xlu0 %v39, 127
  %v566 = vpop.permute.xlu0 %565
  %567 = vrot.lane.b32.xlu0 %v43, 127
  %v568 = vpop.permute.xlu0 %567
  %569 = vrot.lane.b32.xlu0 %v47, 127
  %v570 = vpop.permute.xlu0 %569
  %571 = vrot.lane.b32.xlu0 %v51, 127
  %v572 = vpop.permute.xlu0 %571
  %vm573 = vcmp.lt.s32.totalorder %v85, 127
  %v574 = vsel %vm573, %v558, %v566
  %v575 = vsel %vm573, %v560, %v568
  %v576 = vsel %vm573, %v562, %v570
  %v577 = vsel %vm573, %v564, %v572
  %v578 = vsel %vm573, %v550, %v558
  %v579 = vsel %vm573, %v552, %v560
  %v580 = vsel %vm573, %v554, %v562
  %v581 = vsel %vm573, %v556, %v564
  %v582 = vsel %vm573, %v542, %v550
  %v583 = vsel %vm573, %v544, %v552
  %v584 = vsel %vm573, %v546, %v554
  %v585 = vsel %vm573, %v548, %v556
  %v586 = vsel %vm573, %v566, %v542
  %v587 = vsel %vm573, %v568, %v544
  %v588 = vsel %vm573, %v570, %v546
  %v589 = vsel %vm573, %v572, %v548
  %v590 = vpack.c.bf16 %v583, %v582
  %v591 = vpack.c.bf16 %v579, %v578
  %v592 = vpack.c.bf16 %v575, %v574
  %v593 = vpack.c.bf16 %v587, %v586
  %v594 = vpack.c.bf16 %v585, %v584
  %v595 = vpack.c.bf16 %v581, %v580
  %v596 = vpack.c.bf16 %v577, %v576
  %v597 = vpack.c.bf16 %v589, %v588
  %s598 = scalar_lea.vmem %s1, 20
  %v599 = vld [vmem:[%s598] sm:$0xf]
  %v602 = vunpack.c.l.s4 1966171168
  %v603 = vunpack.c.0.s8 %v602
  %v604 = vlaneseq
  %v605 = vshrl.u32 %v604, 7
  %v606 = vsub.s32 %v603, %v605
  %v607 = vrot.slane %v599, %v606
  %v608 = vcombine.high %v607, %v607
  %v610 = vunpack.c.l.s4 1966171168
  %v611 = vunpack.c.0.s8 %v610
  %v612 = vlaneseq
  %v613 = vshrl.u32 %v612, 7
  %v614 = vsub.s32 %v611, %v613
  %v615 = vrot.slane %v607, %v614
  %v617 = vunpack.c.l.s4 1966171168
  %v618 = vunpack.c.0.s8 %v617
  %v619 = vlaneseq
  %v620 = vshrl.u32 %v619, 7
  %v621 = vsub.s32 %v618, %v620
  %v622 = vrot.slane %v608, %v621
  %v623 = vcombine.high %v615, %v615
  %v624 = vcombine.high %v622, %v622
  %v626 = vpack.i.b16 %v615, %v615
  %v628 = vlaneseq
  %v629 = vshrl.u32 %v628, 7
  %v630 = vsub.s32 0, %v629
  %v631 = vrot.slane %v626, %v630
  %v633 = vpack.i.b16 %v622, %v622
  %v635 = vlaneseq
  %v636 = vshrl.u32 %v635, 7
  %v637 = vsub.s32 0, %v636
  %v638 = vrot.slane %v633, %v637
  %v640 = vpack.i.b16 %v623, %v623
  %v642 = vlaneseq
  %v643 = vshrl.u32 %v642, 7
  %v644 = vsub.s32 0, %v643
  %v645 = vrot.slane %v640, %v644
  %v647 = vpack.i.b16 %v624, %v624
  %v649 = vlaneseq
  %v650 = vshrl.u32 %v649, 7
  %v651 = vsub.s32 0, %v650
  %v652 = vrot.slane %v647, %v651
  %v653 = vmul.bf16 %v590, %v631
  %v654 = vmul.bf16 %v591, %v638
  %v655 = vmul.bf16 %v592, %v645
  %v656 = vmul.bf16 %v593, %v652
  %v657 = vmul.bf16 %v594, %v631
  %v658 = vmul.bf16 %v595, %v638
  %v659 = vmul.bf16 %v596, %v645
  %v660 = vmul.bf16 %v597, %v652
  %661 = vrot.lane.b32.xlu0 %v36, 113
  %v662 = vpop.permute.xlu0 %661
  %663 = vrot.lane.b32.xlu0 %v40, 113
  %v664 = vpop.permute.xlu0 %663
  %665 = vrot.lane.b32.xlu0 %v44, 113
  %v666 = vpop.permute.xlu0 %665
  %667 = vrot.lane.b32.xlu0 %v48, 113
  %v668 = vpop.permute.xlu0 %667
  %669 = vrot.lane.b32.xlu0 %v37, 113
  %v670 = vpop.permute.xlu0 %669
  %671 = vrot.lane.b32.xlu0 %v41, 113
  %v672 = vpop.permute.xlu0 %671
  %673 = vrot.lane.b32.xlu0 %v45, 113
  %v674 = vpop.permute.xlu0 %673
  %675 = vrot.lane.b32.xlu0 %v49, 113
  %v676 = vpop.permute.xlu0 %675
  %677 = vrot.lane.b32.xlu0 %v38, 113
  %v678 = vpop.permute.xlu0 %677
  %679 = vrot.lane.b32.xlu0 %v42, 113
  %v680 = vpop.permute.xlu0 %679
  %681 = vrot.lane.b32.xlu0 %v46, 113
  %v682 = vpop.permute.xlu0 %681
  %683 = vrot.lane.b32.xlu0 %v50, 113
  %v684 = vpop.permute.xlu0 %683
  %685 = vrot.lane.b32.xlu0 %v39, 113
  %v686 = vpop.permute.xlu0 %685
  %687 = vrot.lane.b32.xlu0 %v43, 113
  %v688 = vpop.permute.xlu0 %687
  %689 = vrot.lane.b32.xlu0 %v47, 113
  %v690 = vpop.permute.xlu0 %689
  %691 = vrot.lane.b32.xlu0 %v51, 113
  %v692 = vpop.permute.xlu0 %691
  %vm693 = vcmp.lt.s32.totalorder %v85, 113
  %v694 = vsel %vm693, %v678, %v686
  %v695 = vsel %vm693, %v680, %v688
  %v696 = vsel %vm693, %v682, %v690
  %v697 = vsel %vm693, %v684, %v692
  %v698 = vsel %vm693, %v670, %v678
  %v699 = vsel %vm693, %v672, %v680
  %v700 = vsel %vm693, %v674, %v682
  %v701 = vsel %vm693, %v676, %v684
  %v702 = vsel %vm693, %v662, %v670
  %v703 = vsel %vm693, %v664, %v672
  %v704 = vsel %vm693, %v666, %v674
  %v705 = vsel %vm693, %v668, %v676
  %v706 = vsel %vm693, %v686, %v662
  %v707 = vsel %vm693, %v688, %v664
  %v708 = vsel %vm693, %v690, %v666
  %v709 = vsel %vm693, %v692, %v668
  %v710 = vpack.c.bf16 %v703, %v702
  %v711 = vpack.c.bf16 %v699, %v698
  %v712 = vpack.c.bf16 %v695, %v694
  %v713 = vpack.c.bf16 %v707, %v706
  %v714 = vpack.c.bf16 %v705, %v704
  %v715 = vpack.c.bf16 %v701, %v700
  %v716 = vpack.c.bf16 %v697, %v696
  %v717 = vpack.c.bf16 %v709, %v708
  %s718 = scalar_lea.vmem %s1, 24
  %v719 = vld [vmem:[%s718] sm:$0xf]
  %v722 = vunpack.c.l.s4 1966171168
  %v723 = vunpack.c.0.s8 %v722
  %v724 = vlaneseq
  %v725 = vshrl.u32 %v724, 7
  %v726 = vsub.s32 %v723, %v725
  %v727 = vrot.slane %v719, %v726
  %v728 = vcombine.high %v727, %v727
  %v730 = vunpack.c.l.s4 1966171168
  %v731 = vunpack.c.0.s8 %v730
  %v732 = vlaneseq
  %v733 = vshrl.u32 %v732, 7
  %v734 = vsub.s32 %v731, %v733
  %v735 = vrot.slane %v727, %v734
  %v737 = vunpack.c.l.s4 1966171168
  %v738 = vunpack.c.0.s8 %v737
  %v739 = vlaneseq
  %v740 = vshrl.u32 %v739, 7
  %v741 = vsub.s32 %v738, %v740
  %v742 = vrot.slane %v728, %v741
  %v743 = vcombine.high %v735, %v735
  %v744 = vcombine.high %v742, %v742
  %v746 = vpack.i.b16 %v735, %v735
  %v748 = vlaneseq
  %v749 = vshrl.u32 %v748, 7
  %v750 = vsub.s32 0, %v749
  %v751 = vrot.slane %v746, %v750
  %v753 = vpack.i.b16 %v742, %v742
  %v755 = vlaneseq
  %v756 = vshrl.u32 %v755, 7
  %v757 = vsub.s32 0, %v756
  %v758 = vrot.slane %v753, %v757
  %v760 = vpack.i.b16 %v743, %v743
  %v762 = vlaneseq
  %v763 = vshrl.u32 %v762, 7
  %v764 = vsub.s32 0, %v763
  %v765 = vrot.slane %v760, %v764
  %v767 = vpack.i.b16 %v744, %v744
  %v769 = vlaneseq
  %v770 = vshrl.u32 %v769, 7
  %v771 = vsub.s32 0, %v770
  %v772 = vrot.slane %v767, %v771
  %v773 = vmul.bf16 %v710, %v751
  %v774 = vmul.bf16 %v711, %v758
  %v775 = vmul.bf16 %v712, %v765
  %v776 = vmul.bf16 %v713, %v772
  %v777 = vmul.bf16 %v714, %v751
  %v778 = vmul.bf16 %v715, %v758
  %v779 = vmul.bf16 %v716, %v765
  %v780 = vmul.bf16 %v717, %v772
  %781 = vrot.lane.b32.xlu0 %v36, 112
  %v782 = vpop.permute.xlu0 %781
  %783 = vrot.lane.b32.xlu0 %v40, 112
  %v784 = vpop.permute.xlu0 %783
  %785 = vrot.lane.b32.xlu0 %v44, 112
  %v786 = vpop.permute.xlu0 %785
  %787 = vrot.lane.b32.xlu0 %v48, 112
  %v788 = vpop.permute.xlu0 %787
  %789 = vrot.lane.b32.xlu0 %v37, 112
  %v790 = vpop.permute.xlu0 %789
  %791 = vrot.lane.b32.xlu0 %v41, 112
  %v792 = vpop.permute.xlu0 %791
  %793 = vrot.lane.b32.xlu0 %v45, 112
  %v794 = vpop.permute.xlu0 %793
  %795 = vrot.lane.b32.xlu0 %v49, 112
  %v796 = vpop.permute.xlu0 %795
  %797 = vrot.lane.b32.xlu0 %v38, 112
  %v798 = vpop.permute.xlu0 %797
  %799 = vrot.lane.b32.xlu0 %v42, 112
  %v800 = vpop.permute.xlu0 %799
  %801 = vrot.lane.b32.xlu0 %v46, 112
  %v802 = vpop.permute.xlu0 %801
  %803 = vrot.lane.b32.xlu0 %v50, 112
  %v804 = vpop.permute.xlu0 %803
  %805 = vrot.lane.b32.xlu0 %v39, 112
  %v806 = vpop.permute.xlu0 %805
  %807 = vrot.lane.b32.xlu0 %v43, 112
  %v808 = vpop.permute.xlu0 %807
  %809 = vrot.lane.b32.xlu0 %v47, 112
  %v810 = vpop.permute.xlu0 %809
  %811 = vrot.lane.b32.xlu0 %v51, 112
  %v812 = vpop.permute.xlu0 %811
  %vm813 = vcmp.lt.s32.totalorder %v85, 112
  %v814 = vsel %vm813, %v798, %v806
  %v815 = vsel %vm813, %v800, %v808
  %v816 = vsel %vm813, %v802, %v810
  %v817 = vsel %vm813, %v804, %v812
  %v818 = vsel %vm813, %v790, %v798
  %v819 = vsel %vm813, %v792, %v800
  %v820 = vsel %vm813, %v794, %v802
  %v821 = vsel %vm813, %v796, %v804
  %v822 = vsel %vm813, %v782, %v790
  %v823 = vsel %vm813, %v784, %v792
  %v824 = vsel %vm813, %v786, %v794
  %v825 = vsel %vm813, %v788, %v796
  %v826 = vsel %vm813, %v806, %v782
  %v827 = vsel %vm813, %v808, %v784
  %v828 = vsel %vm813, %v810, %v786
  %v829 = vsel %vm813, %v812, %v788
  %v830 = vpack.c.bf16 %v823, %v822
  %v831 = vpack.c.bf16 %v819, %v818
  %v832 = vpack.c.bf16 %v815, %v814
  %v833 = vpack.c.bf16 %v827, %v826
  %v834 = vpack.c.bf16 %v825, %v824
  %v835 = vpack.c.bf16 %v821, %v820
  %v836 = vpack.c.bf16 %v817, %v816
  %v837 = vpack.c.bf16 %v829, %v828
  %s838 = scalar_lea.vmem %s1, 28
  %v839 = vld [vmem:[%s838] sm:$0xf]
  %v842 = vunpack.c.l.s4 1966171168
  %v843 = vunpack.c.0.s8 %v842
  %v844 = vlaneseq
  %v845 = vshrl.u32 %v844, 7
  %v846 = vsub.s32 %v843, %v845
  %v847 = vrot.slane %v839, %v846
  %v848 = vcombine.high %v847, %v847
  %v850 = vunpack.c.l.s4 1966171168
  %v851 = vunpack.c.0.s8 %v850
  %v852 = vlaneseq
  %v853 = vshrl.u32 %v852, 7
  %v854 = vsub.s32 %v851, %v853
  %v855 = vrot.slane %v847, %v854
  %v857 = vunpack.c.l.s4 1966171168
  %v858 = vunpack.c.0.s8 %v857
  %v859 = vlaneseq
  %v860 = vshrl.u32 %v859, 7
  %v861 = vsub.s32 %v858, %v860
  %v862 = vrot.slane %v848, %v861
  %v863 = vcombine.high %v855, %v855
  %v864 = vcombine.high %v862, %v862
  %v866 = vpack.i.b16 %v855, %v855
  %v868 = vlaneseq
  %v869 = vshrl.u32 %v868, 7
  %v870 = vsub.s32 0, %v869
  %v871 = vrot.slane %v866, %v870
  %v873 = vpack.i.b16 %v862, %v862
  %v875 = vlaneseq
  %v876 = vshrl.u32 %v875, 7
  %v877 = vsub.s32 0, %v876
  %v878 = vrot.slane %v873, %v877
  %v880 = vpack.i.b16 %v863, %v863
  %v882 = vlaneseq
  %v883 = vshrl.u32 %v882, 7
  %v884 = vsub.s32 0, %v883
  %v885 = vrot.slane %v880, %v884
  %v887 = vpack.i.b16 %v864, %v864
  %v889 = vlaneseq
  %v890 = vshrl.u32 %v889, 7
  %v891 = vsub.s32 0, %v890
  %v892 = vrot.slane %v887, %v891
  %v893 = vmul.bf16 %v830, %v871
  %v894 = vmul.bf16 %v831, %v878
  %v895 = vmul.bf16 %v832, %v885
  %v896 = vmul.bf16 %v833, %v892
  %v897 = vmul.bf16 %v834, %v871
  %v898 = vmul.bf16 %v835, %v878
  %v899 = vmul.bf16 %v836, %v885
  %v900 = vmul.bf16 %v837, %v892
  %901 = vrot.lane.b32.xlu0 %v36, 111
  %v902 = vpop.permute.xlu0 %901
  %903 = vrot.lane.b32.xlu0 %v40, 111
  %v904 = vpop.permute.xlu0 %903
  %905 = vrot.lane.b32.xlu0 %v44, 111
  %v906 = vpop.permute.xlu0 %905
  %907 = vrot.lane.b32.xlu0 %v48, 111
  %v908 = vpop.permute.xlu0 %907
  %909 = vrot.lane.b32.xlu0 %v37, 111
  %v910 = vpop.permute.xlu0 %909
  %911 = vrot.lane.b32.xlu0 %v41, 111
  %v912 = vpop.permute.xlu0 %911
  %913 = vrot.lane.b32.xlu0 %v45, 111
  %v914 = vpop.permute.xlu0 %913
  %915 = vrot.lane.b32.xlu0 %v49, 111
  %v916 = vpop.permute.xlu0 %915
  %917 = vrot.lane.b32.xlu0 %v38, 111
  %v918 = vpop.permute.xlu0 %917
  %919 = vrot.lane.b32.xlu0 %v42, 111
  %v920 = vpop.permute.xlu0 %919
  %921 = vrot.lane.b32.xlu0 %v46, 111
  %v922 = vpop.permute.xlu0 %921
  %923 = vrot.lane.b32.xlu0 %v50, 111
  %v924 = vpop.permute.xlu0 %923
  %925 = vrot.lane.b32.xlu0 %v39, 111
  %v926 = vpop.permute.xlu0 %925
  %927 = vrot.lane.b32.xlu0 %v43, 111
  %v928 = vpop.permute.xlu0 %927
  %929 = vrot.lane.b32.xlu0 %v47, 111
  %v930 = vpop.permute.xlu0 %929
  %931 = vrot.lane.b32.xlu0 %v51, 111
  %v932 = vpop.permute.xlu0 %931
  %vm933 = vcmp.lt.s32.totalorder %v85, 111
  %v934 = vsel %vm933, %v918, %v926
  %v935 = vsel %vm933, %v920, %v928
  %v936 = vsel %vm933, %v922, %v930
  %v937 = vsel %vm933, %v924, %v932
  %v938 = vsel %vm933, %v910, %v918
  %v939 = vsel %vm933, %v912, %v920
  %v940 = vsel %vm933, %v914, %v922
  %v941 = vsel %vm933, %v916, %v924
  %v942 = vsel %vm933, %v902, %v910
  %v943 = vsel %vm933, %v904, %v912
  %v944 = vsel %vm933, %v906, %v914
  %v945 = vsel %vm933, %v908, %v916
  %v946 = vsel %vm933, %v926, %v902
  %v947 = vsel %vm933, %v928, %v904
  %v948 = vsel %vm933, %v930, %v906
  %v949 = vsel %vm933, %v932, %v908
  %v950 = vpack.c.bf16 %v943, %v942
  %v951 = vpack.c.bf16 %v939, %v938
  %v952 = vpack.c.bf16 %v935, %v934
  %v953 = vpack.c.bf16 %v947, %v946
  %v954 = vpack.c.bf16 %v945, %v944
  %v955 = vpack.c.bf16 %v941, %v940
  %v956 = vpack.c.bf16 %v937, %v936
  %v957 = vpack.c.bf16 %v949, %v948
  %s958 = scalar_lea.vmem %s1, 32
  %v959 = vld [vmem:[%s958] sm:$0xf]
  %v962 = vunpack.c.l.s4 1966171168
  %v963 = vunpack.c.0.s8 %v962
  %v964 = vlaneseq
  %v965 = vshrl.u32 %v964, 7
  %v966 = vsub.s32 %v963, %v965
  %v967 = vrot.slane %v959, %v966
  %v968 = vcombine.high %v967, %v967
  %v970 = vunpack.c.l.s4 1966171168
  %v971 = vunpack.c.0.s8 %v970
  %v972 = vlaneseq
  %v973 = vshrl.u32 %v972, 7
  %v974 = vsub.s32 %v971, %v973
  %v975 = vrot.slane %v967, %v974
  %v977 = vunpack.c.l.s4 1966171168
  %v978 = vunpack.c.0.s8 %v977
  %v979 = vlaneseq
  %v980 = vshrl.u32 %v979, 7
  %v981 = vsub.s32 %v978, %v980
  %v982 = vrot.slane %v968, %v981
  %v983 = vcombine.high %v975, %v975
  %v984 = vcombine.high %v982, %v982
  %v986 = vpack.i.b16 %v975, %v975
  %v988 = vlaneseq
  %v989 = vshrl.u32 %v988, 7
  %v990 = vsub.s32 0, %v989
  %v991 = vrot.slane %v986, %v990
  %v993 = vpack.i.b16 %v982, %v982
  %v995 = vlaneseq
  %v996 = vshrl.u32 %v995, 7
  %v997 = vsub.s32 0, %v996
  %v998 = vrot.slane %v993, %v997
  %v1000 = vpack.i.b16 %v983, %v983
  %v1002 = vlaneseq
  %v1003 = vshrl.u32 %v1002, 7
  %v1004 = vsub.s32 0, %v1003
  %v1005 = vrot.slane %v1000, %v1004
  %v1007 = vpack.i.b16 %v984, %v984
  %v1009 = vlaneseq
  %v1010 = vshrl.u32 %v1009, 7
  %v1011 = vsub.s32 0, %v1010
  %v1012 = vrot.slane %v1007, %v1011
  %v1013 = vmul.bf16 %v950, %v991
  %v1014 = vmul.bf16 %v951, %v998
  %v1015 = vmul.bf16 %v952, %v1005
  %v1016 = vmul.bf16 %v953, %v1012
  %v1017 = vmul.bf16 %v954, %v991
  %v1018 = vmul.bf16 %v955, %v998
  %v1019 = vmul.bf16 %v956, %v1005
  %v1020 = vmul.bf16 %v957, %v1012
  %v1021 = vld [vmem:[%s2] sm:$0xff]
  %v1022 = vld [vmem:[%s2 + $0x8] sm:$0xf]
  %v1023 = vld [vmem:[%s2 + $0xc] sm:$0xff]
  %v1024 = vld [vmem:[%s2 + $0x14] sm:$0xf]
  %v1025 = vld [vmem:[%s2 + $0x18] sm:$0xff]
  %v1026 = vld [vmem:[%s2 + $0x20] sm:$0xf]
  %v1027 = vld [vmem:[%s2 + $0x24] sm:$0xff]
  %v1028 = vld [vmem:[%s2 + $0x2c] sm:$0xf]
  %v1037 = vunpack.c.l.b16 %v1021
  %v1038 = vunpack.c.h.b16 %v1021
  %v1039 = vunpack.c.l.b16 %v1022
  %v1040 = vunpack.c.l.b16 %v1023
  %v1041 = vunpack.c.h.b16 %v1023
  %v1042 = vunpack.c.l.b16 %v1024
  %v1043 = vunpack.c.l.b16 %v1025
  %v1044 = vunpack.c.h.b16 %v1025
  %v1045 = vunpack.c.l.b16 %v1026
  %v1046 = vunpack.c.l.b16 %v1027
  %v1047 = vunpack.c.h.b16 %v1027
  %v1048 = vunpack.c.l.b16 %v1028
  %v1049 = vpack.c.b16 %v1040, %v1037
  %v1050 = vpack.c.b16 %v1041, %v1038
  %v1051 = vpack.c.b16 %v1042, %v1039
  %v1052 = vpack.c.b16 %v1046, %v1043
  %v1053 = vpack.c.b16 %v1047, %v1044
  %v1054 = vpack.c.b16 %v1048, %v1045
  %vm1059 = vcmask 261120
  %v1061 = vsel %vm1059, %v1051, 0
  %v1064 = vsel %vm1059, %v1054, 0
  %1066 = vmatprep.subr.bf16.mxu0 %v530
  %1067 = vmatpush1.bf16.msra.mxu0 %v529
  %1068 = vmatprep.subr.bf16.mxu0 %v526
  %1069 = vmatpush1.bf16.msra.mxu0 %v525
  %1070 = vmatprep.subr.bf16.mxu0 %v410
  %1071 = vmatpush1.bf16.msra.mxu0 %v409
  %1072 = vmatprep.subr.bf16.mxu0 %v406
  %1073 = vmatpush1.bf16.msra.mxu0 %v405
  %1074 = vmatprep.subr.bf16.mxu0 %v290
  %1075 = vmatpush1.bf16.msra.mxu0 %v289
  %1076 = vmatprep.subr.bf16.mxu0 %v286
  %1077 = vmatpush1.bf16.msra.mxu0 %v285
  %1078 = vmatprep.subr.bf16.mxu0 %v170
  %1079 = vmatpush1.bf16.msra.mxu0 %v169
  %1080 = vmatprep.subr.bf16.mxu0 %v166
  %1081 = vmatpush1.bf16.msra.mxu0 %v165
  %1082 = vmatprep.subr.bf16.mxu0 %v898
  %1083 = vmatpush2.bf16.msra.mxu0 %v897
  %1084 = vmatprep.subr.bf16.mxu0 %v894
  %1085 = vmatpush2.bf16.msra.mxu0 %v893
  %1086 = vmatprep.subr.bf16.mxu0 %v778
  %1087 = vmatpush2.bf16.msra.mxu0 %v777
  %1088 = vmatprep.subr.bf16.mxu0 %v774
  %1089 = vmatpush2.bf16.msra.mxu0 %v773
  %1090 = vmatprep.subr.bf16.mxu0 %v658
  %1091 = vmatpush2.bf16.msra.mxu0 %v657
  %1092 = vmatprep.subr.bf16.mxu0 %v654
  %1093 = vmatpush2.bf16.msra.mxu0 %v653
  %1094 = vmatprep.subr.bf16.mxu0 %v538
  %1095 = vmatpush2.bf16.msra.mxu0 %v537
  %1096 = vmatprep.subr.bf16.mxu0 %v534
  %1097 = vmatpush2.bf16.msra.mxu0 %v533
  %1098 = vmatprep.mubr.bf16.mxu0 %v1050
  %1099 = vmatmul.mubr.bf16.gmra.mxu0 %v1049
  %v1100 = vpop.f32.mrf.mxu0
  %v1101 = vadd.f32 0.0, %v1100
  %v1102 = vpop.f32.mrf.mxu0
  %v1103 = vadd.f32 0.0, %v1102
  %v1104 = vpop.f32.mrf.mxu0
  %v1105 = vadd.f32 0.0, %v1104
  %v1106 = vpop.f32.mrf.mxu0
  %v1107 = vadd.f32 0.0, %v1106
  %1108 = vmatprep.mubr.bf16.mxu0 %v1053
  %1109 = vmatmul.mubr.bf16.gmra.mxu0 %v1052
  %v1110 = vpop.f32.mrf.mxu0
  %v1111 = vadd.f32 0.0, %v1110
  %v1112 = vpop.f32.mrf.mxu0
  %v1113 = vadd.f32 0.0, %v1112
  %v1114 = vpop.f32.mrf.mxu0
  %v1115 = vadd.f32 0.0, %v1114
  %v1116 = vpop.f32.mrf.mxu0
  %v1117 = vadd.f32 0.0, %v1116
  %1118 = vdwg.mxu0
  %1119 = vmatprep.subr.bf16.mxu0 0
  %1120 = vmatpush1.bf16.msra.mxu0 0
  %1121 = vmatprep.subr.bf16.mxu0 0
  %1122 = vmatpush1.bf16.msra.mxu0 0
  %1123 = vmatprep.subr.bf16.mxu0 0
  %1124 = vmatpush1.bf16.msra.mxu0 0
  %1125 = vmatprep.subr.bf16.mxu0 0
  %1126 = vmatpush1.bf16.msra.mxu0 0
  %1127 = vmatprep.subr.bf16.mxu0 0
  %1128 = vmatpush1.bf16.msra.mxu0 0
  %1129 = vmatprep.subr.bf16.mxu0 0
  %1130 = vmatpush1.bf16.msra.mxu0 0
  %1131 = vmatprep.subr.bf16.mxu0 %v1018
  %1132 = vmatpush1.bf16.msra.mxu0 %v1017
  %1133 = vmatprep.subr.bf16.mxu0 %v1014
  %1134 = vmatpush1.bf16.msra.mxu0 %v1013
  %1135 = vmatprep.subr.bf16.mxu0 0
  %1136 = vmatpush2.bf16.msra.mxu0 0
  %1137 = vmatprep.subr.bf16.mxu0 0
  %1138 = vmatpush2.bf16.msra.mxu0 0
  %1139 = vmatprep.subr.bf16.mxu0 0
  %1140 = vmatpush2.bf16.msra.mxu0 0
  %1141 = vmatprep.subr.bf16.mxu0 0
  %1142 = vmatpush2.bf16.msra.mxu0 0
  %1143 = vmatprep.subr.bf16.mxu0 0
  %1144 = vmatpush2.bf16.msra.mxu0 0
  %1145 = vmatprep.subr.bf16.mxu0 0
  %1146 = vmatpush2.bf16.msra.mxu0 0
  %1147 = vmatprep.subr.bf16.mxu0 0
  %1148 = vmatpush2.bf16.msra.mxu0 0
  %1149 = vmatprep.subr.bf16.mxu0 0
  %1150 = vmatpush2.bf16.msra.mxu0 0
  %1151 = vmatprep.mubr.bf16.mxu0 0
  %1152 = vmatmul.mubr.bf16.gmra.mxu0 %v1061
  %v1153 = vpop.f32.mrf.mxu0
  %v1154 = vadd.f32 %v1101, %v1153
  %v1155 = vpop.f32.mrf.mxu0
  %v1156 = vadd.f32 %v1103, %v1155
  %v1157 = vpop.f32.mrf.mxu0
  %v1158 = vadd.f32 %v1105, %v1157
  %v1159 = vpop.f32.mrf.mxu0
  %v1160 = vadd.f32 %v1107, %v1159
  %1161 = vmatprep.mubr.bf16.mxu0 0
  %1162 = vmatmul.mubr.bf16.gmra.mxu0 %v1064
  %v1163 = vpop.f32.mrf.mxu0
  %v1164 = vadd.f32 %v1111, %v1163
  %v1165 = vpop.f32.mrf.mxu0
  %v1166 = vadd.f32 %v1113, %v1165
  %v1167 = vpop.f32.mrf.mxu0
  %v1168 = vadd.f32 %v1115, %v1167
  %v1169 = vpop.f32.mrf.mxu0
  %v1170 = vadd.f32 %v1117, %v1169
  %1171 = vdwg.mxu0
  %1172 = vmatprep.subr.bf16.mxu0 %v532
  %1173 = vmatpush1.bf16.msra.mxu0 %v531
  %1174 = vmatprep.subr.bf16.mxu0 %v528
  %1175 = vmatpush1.bf16.msra.mxu0 %v527
  %1176 = vmatprep.subr.bf16.mxu0 %v412
  %1177 = vmatpush1.bf16.msra.mxu0 %v411
  %1178 = vmatprep.subr.bf16.mxu0 %v408
  %1179 = vmatpush1.bf16.msra.mxu0 %v407
  %1180 = vmatprep.subr.bf16.mxu0 %v292
  %1181 = vmatpush1.bf16.msra.mxu0 %v291
  %1182 = vmatprep.subr.bf16.mxu0 %v288
  %1183 = vmatpush1.bf16.msra.mxu0 %v287
  %1184 = vmatprep.subr.bf16.mxu0 %v172
  %1185 = vmatpush1.bf16.msra.mxu0 %v171
  %1186 = vmatprep.subr.bf16.mxu0 %v168
  %1187 = vmatpush1.bf16.msra.mxu0 %v167
  %1188 = vmatprep.subr.bf16.mxu0 %v900
  %1189 = vmatpush2.bf16.msra.mxu0 %v899
  %1190 = vmatprep.subr.bf16.mxu0 %v896
  %1191 = vmatpush2.bf16.msra.mxu0 %v895
  %1192 = vmatprep.subr.bf16.mxu0 %v780
  %1193 = vmatpush2.bf16.msra.mxu0 %v779
  %1194 = vmatprep.subr.bf16.mxu0 %v776
  %1195 = vmatpush2.bf16.msra.mxu0 %v775
  %1196 = vmatprep.subr.bf16.mxu0 %v660
  %1197 = vmatpush2.bf16.msra.mxu0 %v659
  %1198 = vmatprep.subr.bf16.mxu0 %v656
  %1199 = vmatpush2.bf16.msra.mxu0 %v655
  %1200 = vmatprep.subr.bf16.mxu0 %v540
  %1201 = vmatpush2.bf16.msra.mxu0 %v539
  %1202 = vmatprep.subr.bf16.mxu0 %v536
  %1203 = vmatpush2.bf16.msra.mxu0 %v535
  %1204 = vmatprep.mubr.bf16.mxu0 %v1050
  %1205 = vmatmul.mubr.bf16.gmra.mxu0 %v1049
  %v1206 = vpop.f32.mrf.mxu0
  %v1207 = vadd.f32 0.0, %v1206
  %v1208 = vpop.f32.mrf.mxu0
  %v1209 = vadd.f32 0.0, %v1208
  %v1210 = vpop.f32.mrf.mxu0
  %v1211 = vadd.f32 0.0, %v1210
  %v1212 = vpop.f32.mrf.mxu0
  %v1213 = vadd.f32 0.0, %v1212
  %1214 = vmatprep.mubr.bf16.mxu0 %v1053
  %1215 = vmatmul.mubr.bf16.gmra.mxu0 %v1052
  %v1216 = vpop.f32.mrf.mxu0
  %v1217 = vadd.f32 0.0, %v1216
  %v1218 = vpop.f32.mrf.mxu0
  %v1219 = vadd.f32 0.0, %v1218
  %v1220 = vpop.f32.mrf.mxu0
  %v1221 = vadd.f32 0.0, %v1220
  %v1222 = vpop.f32.mrf.mxu0
  %v1223 = vadd.f32 0.0, %v1222
  %1224 = vdwg.mxu0
  %1225 = vmatprep.subr.bf16.mxu0 0
  %1226 = vmatpush1.bf16.msra.mxu0 0
  %1227 = vmatprep.subr.bf16.mxu0 0
  %1228 = vmatpush1.bf16.msra.mxu0 0
  %1229 = vmatprep.subr.bf16.mxu0 0
  %1230 = vmatpush1.bf16.msra.mxu0 0
  %1231 = vmatprep.subr.bf16.mxu0 0
  %1232 = vmatpush1.bf16.msra.mxu0 0
  %1233 = vmatprep.subr.bf16.mxu0 0
  %1234 = vmatpush1.bf16.msra.mxu0 0
  %1235 = vmatprep.subr.bf16.mxu0 0
  %1236 = vmatpush1.bf16.msra.mxu0 0
  %1237 = vmatprep.subr.bf16.mxu0 %v1020
  %1238 = vmatpush1.bf16.msra.mxu0 %v1019
  %1239 = vmatprep.subr.bf16.mxu0 %v1016
  %1240 = vmatpush1.bf16.msra.mxu0 %v1015
  %1241 = vmatprep.subr.bf16.mxu0 0
  %1242 = vmatpush2.bf16.msra.mxu0 0
  %1243 = vmatprep.subr.bf16.mxu0 0
  %1244 = vmatpush2.bf16.msra.mxu0 0
  %1245 = vmatprep.subr.bf16.mxu0 0
  %1246 = vmatpush2.bf16.msra.mxu0 0
  %1247 = vmatprep.subr.bf16.mxu0 0
  %1248 = vmatpush2.bf16.msra.mxu0 0
  %1249 = vmatprep.subr.bf16.mxu0 0
  %1250 = vmatpush2.bf16.msra.mxu0 0
  %1251 = vmatprep.subr.bf16.mxu0 0
  %1252 = vmatpush2.bf16.msra.mxu0 0
  %1253 = vmatprep.subr.bf16.mxu0 0
  %1254 = vmatpush2.bf16.msra.mxu0 0
  %1255 = vmatprep.subr.bf16.mxu0 0
  %1256 = vmatpush2.bf16.msra.mxu0 0
  %1257 = vmatprep.mubr.bf16.mxu0 0
  %1258 = vmatmul.mubr.bf16.gmra.mxu0 %v1061
  %v1259 = vpop.f32.mrf.mxu0
  %v1260 = vadd.f32 %v1207, %v1259
  %v1261 = vpop.f32.mrf.mxu0
  %v1262 = vadd.f32 %v1209, %v1261
  %v1263 = vpop.f32.mrf.mxu0
  %v1264 = vadd.f32 %v1211, %v1263
  %v1265 = vpop.f32.mrf.mxu0
  %v1266 = vadd.f32 %v1213, %v1265
  %1267 = vmatprep.mubr.bf16.mxu0 0
  %1268 = vmatmul.mubr.bf16.gmra.mxu0 %v1064
  %v1269 = vpop.f32.mrf.mxu0
  %v1270 = vadd.f32 %v1217, %v1269
  %v1271 = vpop.f32.mrf.mxu0
  %v1272 = vadd.f32 %v1219, %v1271
  %v1273 = vpop.f32.mrf.mxu0
  %v1274 = vadd.f32 %v1221, %v1273
  %v1275 = vpop.f32.mrf.mxu0
  %v1276 = vadd.f32 %v1223, %v1275
  %1277 = vdwg.mxu0
  %v1278 = vadd.f32 %v1154, %v1156
  %v1279 = vadd.f32 %v1278, %v1260
  %v1280 = vadd.f32 %v1279, %v1262
  %1281 = vadd.xlane.f32.xlu0 %v1280
  %v1282 = vpop.xlane.xlu0 %1281
  %v1283 = vadd.f32 %v1158, %v1160
  %v1284 = vadd.f32 %v1283, %v1264
  %v1285 = vadd.f32 %v1284, %v1266
  %1286 = vadd.xlane.f32.xlu0 %v1285
  %v1287 = vpop.xlane.xlu0 %1286
  %v1288 = vadd.f32 %v1164, %v1166
  %v1289 = vadd.f32 %v1288, %v1270
  %v1290 = vadd.f32 %v1289, %v1272
  %1291 = vadd.xlane.f32.xlu0 %v1290
  %v1292 = vpop.xlane.xlu0 %1291
  %v1293 = vadd.f32 %v1168, %v1170
  %v1294 = vadd.f32 %v1293, %v1274
  %v1295 = vadd.f32 %v1294, %v1276
  %1296 = vadd.xlane.f32.xlu0 %v1295
  %v1297 = vpop.xlane.xlu0 %1296
  %v1298 = vrcp.pop 512.0
  %v1299 = vmul.f32 %v1282, %v1298
  %v1300 = vmul.f32 %v1287, %v1298
  %v1301 = vmul.f32 %v1292, %v1298
  %v1302 = vmul.f32 %v1297, %v1298
  %v1303 = vsub.f32 %v1154, %v1299
  %v1304 = vsub.f32 %v1156, %v1299
  %v1305 = vsub.f32 %v1260, %v1299
  %v1306 = vsub.f32 %v1262, %v1299
  %v1307 = vsub.f32 %v1158, %v1300
  %v1308 = vsub.f32 %v1160, %v1300
  %v1309 = vsub.f32 %v1264, %v1300
  %v1310 = vsub.f32 %v1266, %v1300
  %v1311 = vsub.f32 %v1164, %v1301
  %v1312 = vsub.f32 %v1166, %v1301
  %v1313 = vsub.f32 %v1270, %v1301
  %v1314 = vsub.f32 %v1272, %v1301
  %v1315 = vsub.f32 %v1168, %v1302
  %v1316 = vsub.f32 %v1170, %v1302
  %v1317 = vsub.f32 %v1274, %v1302
  %v1318 = vsub.f32 %v1276, %v1302
  %v1319 = vmul.f32 %v1303, %v1303
  %v1320 = vmul.f32 %v1304, %v1304
  %v1321 = vmul.f32 %v1305, %v1305
  %v1322 = vmul.f32 %v1306, %v1306
  %v1323 = vmul.f32 %v1307, %v1307
  %v1324 = vmul.f32 %v1308, %v1308
  %v1325 = vmul.f32 %v1309, %v1309
  %v1326 = vmul.f32 %v1310, %v1310
  %v1327 = vmul.f32 %v1311, %v1311
  %v1328 = vmul.f32 %v1312, %v1312
  %v1329 = vmul.f32 %v1313, %v1313
  %v1330 = vmul.f32 %v1314, %v1314
  %v1331 = vmul.f32 %v1315, %v1315
  %v1332 = vmul.f32 %v1316, %v1316
  %v1333 = vmul.f32 %v1317, %v1317
  %v1334 = vmul.f32 %v1318, %v1318
  %v1335 = vadd.f32 %v1319, %v1320
  %v1336 = vadd.f32 %v1335, %v1321
  %v1337 = vadd.f32 %v1336, %v1322
  %1338 = vadd.xlane.f32.xlu0 %v1337
  %v1339 = vpop.xlane.xlu0 %1338
  %v1340 = vadd.f32 %v1323, %v1324
  %v1341 = vadd.f32 %v1340, %v1325
  %v1342 = vadd.f32 %v1341, %v1326
  %1343 = vadd.xlane.f32.xlu0 %v1342
  %v1344 = vpop.xlane.xlu0 %1343
  %v1345 = vadd.f32 %v1327, %v1328
  %v1346 = vadd.f32 %v1345, %v1329
  %v1347 = vadd.f32 %v1346, %v1330
  %1348 = vadd.xlane.f32.xlu0 %v1347
  %v1349 = vpop.xlane.xlu0 %1348
  %v1350 = vadd.f32 %v1331, %v1332
  %v1351 = vadd.f32 %v1350, %v1333
  %v1352 = vadd.f32 %v1351, %v1334
  %1353 = vadd.xlane.f32.xlu0 %v1352
  %v1354 = vpop.xlane.xlu0 %1353
  %v1355 = vmul.f32 %v1339, %v1298
  %v1356 = vmul.f32 %v1344, %v1298
  %v1357 = vmul.f32 %v1349, %v1298
  %v1358 = vmul.f32 %v1354, %v1298
  %v1359 = vadd.f32 %v1355, 1e-05
  %v1360 = vadd.f32 %v1356, 1e-05
  %v1361 = vadd.f32 %v1357, 1e-05
  %v1362 = vadd.f32 %v1358, 1e-05
  %v1363 = vrsqrt.pop %v1359
  %v1364 = vrsqrt.pop %v1360
  %v1365 = vrsqrt.pop %v1361
  %v1366 = vrsqrt.pop %v1362
  %v1367 = vmul.f32 %v1303, %v1363
  %v1368 = vmul.f32 %v1304, %v1363
  %v1369 = vmul.f32 %v1305, %v1363
  %v1370 = vmul.f32 %v1306, %v1363
  %v1371 = vmul.f32 %v1307, %v1364
  %v1372 = vmul.f32 %v1308, %v1364
  %v1373 = vmul.f32 %v1309, %v1364
  %v1374 = vmul.f32 %v1310, %v1364
  %v1375 = vmul.f32 %v1311, %v1365
  %v1376 = vmul.f32 %v1312, %v1365
  %v1377 = vmul.f32 %v1313, %v1365
  %v1378 = vmul.f32 %v1314, %v1365
  %v1379 = vmul.f32 %v1315, %v1366
  %v1380 = vmul.f32 %v1316, %v1366
  %v1381 = vmul.f32 %v1317, %v1366
  %v1382 = vmul.f32 %v1318, %v1366
  %v1383 = vld [vmem:[%s3] sm:$0xff]
  %v1384 = vld [vmem:[%s3 + $0x8] sm:$0xff]
  %v1385 = vld [vmem:[%s3 + $0x10] sm:$0xff]
  %v1386 = vld [vmem:[%s3 + $0x18] sm:$0xff]
  %1388 = vset.pattern.permute.xlu0 0
  %1389 = vperm.xlu0 %1388, %v1383
  %v1390 = vpop.permute.xlu0 %1389
  %1393 = vset.pattern.permute.xlu0 0
  %1394 = vperm.xlu0 %1393, %v1384
  %v1395 = vpop.permute.xlu0 %1394
  %1398 = vset.pattern.permute.xlu0 0
  %1399 = vperm.xlu0 %1398, %v1385
  %v1400 = vpop.permute.xlu0 %1399
  %1403 = vset.pattern.permute.xlu0 0
  %1404 = vperm.xlu0 %1403, %v1386
  %v1405 = vpop.permute.xlu0 %1404
  %v1407 = vmul.f32 %v1367, %v1390
  %v1408 = vmul.f32 %v1368, %v1390
  %v1409 = vmul.f32 %v1369, %v1390
  %v1410 = vmul.f32 %v1370, %v1390
  %v1411 = vmul.f32 %v1371, %v1395
  %v1412 = vmul.f32 %v1372, %v1395
  %v1413 = vmul.f32 %v1373, %v1395
  %v1414 = vmul.f32 %v1374, %v1395
  %v1415 = vmul.f32 %v1375, %v1400
  %v1416 = vmul.f32 %v1376, %v1400
  %v1417 = vmul.f32 %v1377, %v1400
  %v1418 = vmul.f32 %v1378, %v1400
  %v1419 = vmul.f32 %v1379, %v1405
  %v1420 = vmul.f32 %v1380, %v1405
  %v1421 = vmul.f32 %v1381, %v1405
  %v1422 = vmul.f32 %v1382, %v1405
  %v1423 = vld [vmem:[%s4] sm:$0xff]
  %v1424 = vld [vmem:[%s4 + $0x8] sm:$0xff]
  %v1425 = vld [vmem:[%s4 + $0x10] sm:$0xff]
  %v1426 = vld [vmem:[%s4 + $0x18] sm:$0xff]
  %1428 = vset.pattern.permute.xlu0 0
  %1429 = vperm.xlu0 %1428, %v1423
  %v1430 = vpop.permute.xlu0 %1429
  %1433 = vset.pattern.permute.xlu0 0
  %1434 = vperm.xlu0 %1433, %v1424
  %v1435 = vpop.permute.xlu0 %1434
  %1438 = vset.pattern.permute.xlu0 0
  %1439 = vperm.xlu0 %1438, %v1425
  %v1440 = vpop.permute.xlu0 %1439
  %1443 = vset.pattern.permute.xlu0 0
  %1444 = vperm.xlu0 %1443, %v1426
  %v1445 = vpop.permute.xlu0 %1444
  %v1447 = vadd.f32 %v1407, %v1430
  %v1448 = vadd.f32 %v1408, %v1430
  %v1449 = vadd.f32 %v1409, %v1430
  %v1450 = vadd.f32 %v1410, %v1430
  %v1451 = vadd.f32 %v1411, %v1435
  %v1452 = vadd.f32 %v1412, %v1435
  %v1453 = vadd.f32 %v1413, %v1435
  %v1454 = vadd.f32 %v1414, %v1435
  %v1455 = vadd.f32 %v1415, %v1440
  %v1456 = vadd.f32 %v1416, %v1440
  %v1457 = vadd.f32 %v1417, %v1440
  %v1458 = vadd.f32 %v1418, %v1440
  %v1459 = vadd.f32 %v1419, %v1445
  %v1460 = vadd.f32 %v1420, %v1445
  %v1461 = vadd.f32 %v1421, %v1445
  %v1462 = vadd.f32 %v1422, %v1445
  %v1463 = vmax.f32 %v1447, 0.0
  %v1464 = vmax.f32 %v1448, 0.0
  %v1465 = vmax.f32 %v1449, 0.0
  %v1466 = vmax.f32 %v1450, 0.0
  %v1467 = vmax.f32 %v1451, 0.0
  %v1468 = vmax.f32 %v1452, 0.0
  %v1469 = vmax.f32 %v1453, 0.0
  %v1470 = vmax.f32 %v1454, 0.0
  %v1471 = vmax.f32 %v1455, 0.0
  %v1472 = vmax.f32 %v1456, 0.0
  %v1473 = vmax.f32 %v1457, 0.0
  %v1474 = vmax.f32 %v1458, 0.0
  %v1475 = vmax.f32 %v1459, 0.0
  %v1476 = vmax.f32 %v1460, 0.0
  %v1477 = vmax.f32 %v1461, 0.0
  %v1478 = vmax.f32 %v1462, 0.0
  %1479 = vrot.lane.b32.xlu0 %v1463, 17
  %v1480 = vpop.permute.xlu0 %1479
  %1481 = vrot.lane.b32.xlu0 %v1467, 17
  %v1482 = vpop.permute.xlu0 %1481
  %1483 = vrot.lane.b32.xlu0 %v1471, 17
  %v1484 = vpop.permute.xlu0 %1483
  %1485 = vrot.lane.b32.xlu0 %v1475, 17
  %v1486 = vpop.permute.xlu0 %1485
  %1487 = vrot.lane.b32.xlu0 %v1464, 17
  %v1488 = vpop.permute.xlu0 %1487
  %1489 = vrot.lane.b32.xlu0 %v1468, 17
  %v1490 = vpop.permute.xlu0 %1489
  %1491 = vrot.lane.b32.xlu0 %v1472, 17
  %v1492 = vpop.permute.xlu0 %1491
  %1493 = vrot.lane.b32.xlu0 %v1476, 17
  %v1494 = vpop.permute.xlu0 %1493
  %1495 = vrot.lane.b32.xlu0 %v1465, 17
  %v1496 = vpop.permute.xlu0 %1495
  %1497 = vrot.lane.b32.xlu0 %v1469, 17
  %v1498 = vpop.permute.xlu0 %1497
  %1499 = vrot.lane.b32.xlu0 %v1473, 17
  %v1500 = vpop.permute.xlu0 %1499
  %1501 = vrot.lane.b32.xlu0 %v1477, 17
  %v1502 = vpop.permute.xlu0 %1501
  %1503 = vrot.lane.b32.xlu0 %v1466, 17
  %v1504 = vpop.permute.xlu0 %1503
  %1505 = vrot.lane.b32.xlu0 %v1470, 17
  %v1506 = vpop.permute.xlu0 %1505
  %1507 = vrot.lane.b32.xlu0 %v1474, 17
  %v1508 = vpop.permute.xlu0 %1507
  %1509 = vrot.lane.b32.xlu0 %v1478, 17
  %v1510 = vpop.permute.xlu0 %1509
  %v1511 = vsel %vm86, %v1496, %v1504
  %v1512 = vsel %vm86, %v1498, %v1506
  %v1513 = vsel %vm86, %v1500, %v1508
  %v1514 = vsel %vm86, %v1502, %v1510
  %v1515 = vsel %vm86, %v1488, %v1496
  %v1516 = vsel %vm86, %v1490, %v1498
  %v1517 = vsel %vm86, %v1492, %v1500
  %v1518 = vsel %vm86, %v1494, %v1502
  %v1519 = vsel %vm86, %v1480, %v1488
  %v1520 = vsel %vm86, %v1482, %v1490
  %v1521 = vsel %vm86, %v1484, %v1492
  %v1522 = vsel %vm86, %v1486, %v1494
  %v1523 = vsel %vm86, %v1504, %v1480
  %v1524 = vsel %vm86, %v1506, %v1482
  %v1525 = vsel %vm86, %v1508, %v1484
  %v1526 = vsel %vm86, %v1510, %v1486
  %v1527 = vpack.c.bf16 %v1524, %v1523
  %v1528 = vpack.c.bf16 %v1520, %v1519
  %v1529 = vpack.c.bf16 %v1516, %v1515
  %v1530 = vpack.c.bf16 %v1512, %v1511
  %v1531 = vpack.c.bf16 %v1526, %v1525
  %v1532 = vpack.c.bf16 %v1522, %v1521
  %v1533 = vpack.c.bf16 %v1518, %v1517
  %v1534 = vpack.c.bf16 %v1514, %v1513
  %v1535 = vmul.bf16 %v1527, %v143
  %v1536 = vmul.bf16 %v1528, %v150
  %v1537 = vmul.bf16 %v1529, %v157
  %v1538 = vmul.bf16 %v1530, %v164
  %v1539 = vmul.bf16 %v1531, %v143
  %v1540 = vmul.bf16 %v1532, %v150
  %v1541 = vmul.bf16 %v1533, %v157
  %v1542 = vmul.bf16 %v1534, %v164
  %1543 = vrot.lane.b32.xlu0 %v1463, 16
  %v1544 = vpop.permute.xlu0 %1543
  %1545 = vrot.lane.b32.xlu0 %v1467, 16
  %v1546 = vpop.permute.xlu0 %1545
  %1547 = vrot.lane.b32.xlu0 %v1471, 16
  %v1548 = vpop.permute.xlu0 %1547
  %1549 = vrot.lane.b32.xlu0 %v1475, 16
  %v1550 = vpop.permute.xlu0 %1549
  %1551 = vrot.lane.b32.xlu0 %v1464, 16
  %v1552 = vpop.permute.xlu0 %1551
  %1553 = vrot.lane.b32.xlu0 %v1468, 16
  %v1554 = vpop.permute.xlu0 %1553
  %1555 = vrot.lane.b32.xlu0 %v1472, 16
  %v1556 = vpop.permute.xlu0 %1555
  %1557 = vrot.lane.b32.xlu0 %v1476, 16
  %v1558 = vpop.permute.xlu0 %1557
  %1559 = vrot.lane.b32.xlu0 %v1465, 16
  %v1560 = vpop.permute.xlu0 %1559
  %1561 = vrot.lane.b32.xlu0 %v1469, 16
  %v1562 = vpop.permute.xlu0 %1561
  %1563 = vrot.lane.b32.xlu0 %v1473, 16
  %v1564 = vpop.permute.xlu0 %1563
  %1565 = vrot.lane.b32.xlu0 %v1477, 16
  %v1566 = vpop.permute.xlu0 %1565
  %1567 = vrot.lane.b32.xlu0 %v1466, 16
  %v1568 = vpop.permute.xlu0 %1567
  %1569 = vrot.lane.b32.xlu0 %v1470, 16
  %v1570 = vpop.permute.xlu0 %1569
  %1571 = vrot.lane.b32.xlu0 %v1474, 16
  %v1572 = vpop.permute.xlu0 %1571
  %1573 = vrot.lane.b32.xlu0 %v1478, 16
  %v1574 = vpop.permute.xlu0 %1573
  %v1575 = vsel %vm205, %v1560, %v1568
  %v1576 = vsel %vm205, %v1562, %v1570
  %v1577 = vsel %vm205, %v1564, %v1572
  %v1578 = vsel %vm205, %v1566, %v1574
  %v1579 = vsel %vm205, %v1552, %v1560
  %v1580 = vsel %vm205, %v1554, %v1562
  %v1581 = vsel %vm205, %v1556, %v1564
  %v1582 = vsel %vm205, %v1558, %v1566
  %v1583 = vsel %vm205, %v1544, %v1552
  %v1584 = vsel %vm205, %v1546, %v1554
  %v1585 = vsel %vm205, %v1548, %v1556
  %v1586 = vsel %vm205, %v1550, %v1558
  %v1587 = vsel %vm205, %v1568, %v1544
  %v1588 = vsel %vm205, %v1570, %v1546
  %v1589 = vsel %vm205, %v1572, %v1548
  %v1590 = vsel %vm205, %v1574, %v1550
  %v1591 = vpack.c.bf16 %v1588, %v1587
  %v1592 = vpack.c.bf16 %v1584, %v1583
  %v1593 = vpack.c.bf16 %v1580, %v1579
  %v1594 = vpack.c.bf16 %v1576, %v1575
  %v1595 = vpack.c.bf16 %v1590, %v1589
  %v1596 = vpack.c.bf16 %v1586, %v1585
  %v1597 = vpack.c.bf16 %v1582, %v1581
  %v1598 = vpack.c.bf16 %v1578, %v1577
  %v1599 = vmul.bf16 %v1591, %v263
  %v1600 = vmul.bf16 %v1592, %v270
  %v1601 = vmul.bf16 %v1593, %v277
  %v1602 = vmul.bf16 %v1594, %v284
  %v1603 = vmul.bf16 %v1595, %v263
  %v1604 = vmul.bf16 %v1596, %v270
  %v1605 = vmul.bf16 %v1597, %v277
  %v1606 = vmul.bf16 %v1598, %v284
  %1607 = vrot.lane.b32.xlu0 %v1463, 15
  %v1608 = vpop.permute.xlu0 %1607
  %1609 = vrot.lane.b32.xlu0 %v1467, 15
  %v1610 = vpop.permute.xlu0 %1609
  %1611 = vrot.lane.b32.xlu0 %v1471, 15
  %v1612 = vpop.permute.xlu0 %1611
  %1613 = vrot.lane.b32.xlu0 %v1475, 15
  %v1614 = vpop.permute.xlu0 %1613
  %1615 = vrot.lane.b32.xlu0 %v1464, 15
  %v1616 = vpop.permute.xlu0 %1615
  %1617 = vrot.lane.b32.xlu0 %v1468, 15
  %v1618 = vpop.permute.xlu0 %1617
  %1619 = vrot.lane.b32.xlu0 %v1472, 15
  %v1620 = vpop.permute.xlu0 %1619
  %1621 = vrot.lane.b32.xlu0 %v1476, 15
  %v1622 = vpop.permute.xlu0 %1621
  %1623 = vrot.lane.b32.xlu0 %v1465, 15
  %v1624 = vpop.permute.xlu0 %1623
  %1625 = vrot.lane.b32.xlu0 %v1469, 15
  %v1626 = vpop.permute.xlu0 %1625
  %1627 = vrot.lane.b32.xlu0 %v1473, 15
  %v1628 = vpop.permute.xlu0 %1627
  %1629 = vrot.lane.b32.xlu0 %v1477, 15
  %v1630 = vpop.permute.xlu0 %1629
  %1631 = vrot.lane.b32.xlu0 %v1466, 15
  %v1632 = vpop.permute.xlu0 %1631
  %1633 = vrot.lane.b32.xlu0 %v1470, 15
  %v1634 = vpop.permute.xlu0 %1633
  %1635 = vrot.lane.b32.xlu0 %v1474, 15
  %v1636 = vpop.permute.xlu0 %1635
  %1637 = vrot.lane.b32.xlu0 %v1478, 15
  %v1638 = vpop.permute.xlu0 %1637
  %v1639 = vsel %vm325, %v1624, %v1632
  %v1640 = vsel %vm325, %v1626, %v1634
  %v1641 = vsel %vm325, %v1628, %v1636
  %v1642 = vsel %vm325, %v1630, %v1638
  %v1643 = vsel %vm325, %v1616, %v1624
  %v1644 = vsel %vm325, %v1618, %v1626
  %v1645 = vsel %vm325, %v1620, %v1628
  %v1646 = vsel %vm325, %v1622, %v1630
  %v1647 = vsel %vm325, %v1608, %v1616
  %v1648 = vsel %vm325, %v1610, %v1618
  %v1649 = vsel %vm325, %v1612, %v1620
  %v1650 = vsel %vm325, %v1614, %v1622
  %v1651 = vsel %vm325, %v1632, %v1608
  %v1652 = vsel %vm325, %v1634, %v1610
  %v1653 = vsel %vm325, %v1636, %v1612
  %v1654 = vsel %vm325, %v1638, %v1614
  %v1655 = vpack.c.bf16 %v1652, %v1651
  %v1656 = vpack.c.bf16 %v1648, %v1647
  %v1657 = vpack.c.bf16 %v1644, %v1643
  %v1658 = vpack.c.bf16 %v1640, %v1639
  %v1659 = vpack.c.bf16 %v1654, %v1653
  %v1660 = vpack.c.bf16 %v1650, %v1649
  %v1661 = vpack.c.bf16 %v1646, %v1645
  %v1662 = vpack.c.bf16 %v1642, %v1641
  %v1663 = vmul.bf16 %v1655, %v383
  %v1664 = vmul.bf16 %v1656, %v390
  %v1665 = vmul.bf16 %v1657, %v397
  %v1666 = vmul.bf16 %v1658, %v404
  %v1667 = vmul.bf16 %v1659, %v383
  %v1668 = vmul.bf16 %v1660, %v390
  %v1669 = vmul.bf16 %v1661, %v397
  %v1670 = vmul.bf16 %v1662, %v404
  %1671 = vrot.lane.b32.xlu0 %v1463, 1
  %v1672 = vpop.permute.xlu0 %1671
  %1673 = vrot.lane.b32.xlu0 %v1467, 1
  %v1674 = vpop.permute.xlu0 %1673
  %1675 = vrot.lane.b32.xlu0 %v1471, 1
  %v1676 = vpop.permute.xlu0 %1675
  %1677 = vrot.lane.b32.xlu0 %v1475, 1
  %v1678 = vpop.permute.xlu0 %1677
  %1679 = vrot.lane.b32.xlu0 %v1464, 1
  %v1680 = vpop.permute.xlu0 %1679
  %1681 = vrot.lane.b32.xlu0 %v1468, 1
  %v1682 = vpop.permute.xlu0 %1681
  %1683 = vrot.lane.b32.xlu0 %v1472, 1
  %v1684 = vpop.permute.xlu0 %1683
  %1685 = vrot.lane.b32.xlu0 %v1476, 1
  %v1686 = vpop.permute.xlu0 %1685
  %1687 = vrot.lane.b32.xlu0 %v1465, 1
  %v1688 = vpop.permute.xlu0 %1687
  %1689 = vrot.lane.b32.xlu0 %v1469, 1
  %v1690 = vpop.permute.xlu0 %1689
  %1691 = vrot.lane.b32.xlu0 %v1473, 1
  %v1692 = vpop.permute.xlu0 %1691
  %1693 = vrot.lane.b32.xlu0 %v1477, 1
  %v1694 = vpop.permute.xlu0 %1693
  %1695 = vrot.lane.b32.xlu0 %v1466, 1
  %v1696 = vpop.permute.xlu0 %1695
  %1697 = vrot.lane.b32.xlu0 %v1470, 1
  %v1698 = vpop.permute.xlu0 %1697
  %1699 = vrot.lane.b32.xlu0 %v1474, 1
  %v1700 = vpop.permute.xlu0 %1699
  %1701 = vrot.lane.b32.xlu0 %v1478, 1
  %v1702 = vpop.permute.xlu0 %1701
  %v1703 = vsel %vm445, %v1688, %v1696
  %v1704 = vsel %vm445, %v1690, %v1698
  %v1705 = vsel %vm445, %v1692, %v1700
  %v1706 = vsel %vm445, %v1694, %v1702
  %v1707 = vsel %vm445, %v1680, %v1688
  %v1708 = vsel %vm445, %v1682, %v1690
  %v1709 = vsel %vm445, %v1684, %v1692
  %v1710 = vsel %vm445, %v1686, %v1694
  %v1711 = vsel %vm445, %v1672, %v1680
  %v1712 = vsel %vm445, %v1674, %v1682
  %v1713 = vsel %vm445, %v1676, %v1684
  %v1714 = vsel %vm445, %v1678, %v1686
  %v1715 = vsel %vm445, %v1696, %v1672
  %v1716 = vsel %vm445, %v1698, %v1674
  %v1717 = vsel %vm445, %v1700, %v1676
  %v1718 = vsel %vm445, %v1702, %v1678
  %v1719 = vpack.c.bf16 %v1716, %v1715
  %v1720 = vpack.c.bf16 %v1712, %v1711
  %v1721 = vpack.c.bf16 %v1708, %v1707
  %v1722 = vpack.c.bf16 %v1704, %v1703
  %v1723 = vpack.c.bf16 %v1718, %v1717
  %v1724 = vpack.c.bf16 %v1714, %v1713
  %v1725 = vpack.c.bf16 %v1710, %v1709
  %v1726 = vpack.c.bf16 %v1706, %v1705
  %v1727 = vmul.bf16 %v1719, %v503
  %v1728 = vmul.bf16 %v1720, %v510
  %v1729 = vmul.bf16 %v1721, %v517
  %v1730 = vmul.bf16 %v1722, %v524
  %v1731 = vmul.bf16 %v1723, %v503
  %v1732 = vmul.bf16 %v1724, %v510
  %v1733 = vmul.bf16 %v1725, %v517
  %v1734 = vmul.bf16 %v1726, %v524
  %v1735 = vpack.c.bf16 %v1467, %v1463
  %v1736 = vpack.c.bf16 %v1468, %v1464
  %v1737 = vpack.c.bf16 %v1469, %v1465
  %v1738 = vpack.c.bf16 %v1470, %v1466
  %v1739 = vpack.c.bf16 %v1475, %v1471
  %v1740 = vpack.c.bf16 %v1476, %v1472
  %v1741 = vpack.c.bf16 %v1477, %v1473
  %v1742 = vpack.c.bf16 %v1478, %v1474
  %1743 = vrot.lane.b32.xlu0 %v1463, 127
  %v1744 = vpop.permute.xlu0 %1743
  %1745 = vrot.lane.b32.xlu0 %v1467, 127
  %v1746 = vpop.permute.xlu0 %1745
  %1747 = vrot.lane.b32.xlu0 %v1471, 127
  %v1748 = vpop.permute.xlu0 %1747
  %1749 = vrot.lane.b32.xlu0 %v1475, 127
  %v1750 = vpop.permute.xlu0 %1749
  %1751 = vrot.lane.b32.xlu0 %v1464, 127
  %v1752 = vpop.permute.xlu0 %1751
  %1753 = vrot.lane.b32.xlu0 %v1468, 127
  %v1754 = vpop.permute.xlu0 %1753
  %1755 = vrot.lane.b32.xlu0 %v1472, 127
  %v1756 = vpop.permute.xlu0 %1755
  %1757 = vrot.lane.b32.xlu0 %v1476, 127
  %v1758 = vpop.permute.xlu0 %1757
  %1759 = vrot.lane.b32.xlu0 %v1465, 127
  %v1760 = vpop.permute.xlu0 %1759
  %1761 = vrot.lane.b32.xlu0 %v1469, 127
  %v1762 = vpop.permute.xlu0 %1761
  %1763 = vrot.lane.b32.xlu0 %v1473, 127
  %v1764 = vpop.permute.xlu0 %1763
  %1765 = vrot.lane.b32.xlu0 %v1477, 127
  %v1766 = vpop.permute.xlu0 %1765
  %1767 = vrot.lane.b32.xlu0 %v1466, 127
  %v1768 = vpop.permute.xlu0 %1767
  %1769 = vrot.lane.b32.xlu0 %v1470, 127
  %v1770 = vpop.permute.xlu0 %1769
  %1771 = vrot.lane.b32.xlu0 %v1474, 127
  %v1772 = vpop.permute.xlu0 %1771
  %1773 = vrot.lane.b32.xlu0 %v1478, 127
  %v1774 = vpop.permute.xlu0 %1773
  %v1775 = vsel %vm573, %v1760, %v1768
  %v1776 = vsel %vm573, %v1762, %v1770
  %v1777 = vsel %vm573, %v1764, %v1772
  %v1778 = vsel %vm573, %v1766, %v1774
  %v1779 = vsel %vm573, %v1752, %v1760
  %v1780 = vsel %vm573, %v1754, %v1762
  %v1781 = vsel %vm573, %v1756, %v1764
  %v1782 = vsel %vm573, %v1758, %v1766
  %v1783 = vsel %vm573, %v1744, %v1752
  %v1784 = vsel %vm573, %v1746, %v1754
  %v1785 = vsel %vm573, %v1748, %v1756
  %v1786 = vsel %vm573, %v1750, %v1758
  %v1787 = vsel %vm573, %v1768, %v1744
  %v1788 = vsel %vm573, %v1770, %v1746
  %v1789 = vsel %vm573, %v1772, %v1748
  %v1790 = vsel %vm573, %v1774, %v1750
  %v1791 = vpack.c.bf16 %v1784, %v1783
  %v1792 = vpack.c.bf16 %v1780, %v1779
  %v1793 = vpack.c.bf16 %v1776, %v1775
  %v1794 = vpack.c.bf16 %v1788, %v1787
  %v1795 = vpack.c.bf16 %v1786, %v1785
  %v1796 = vpack.c.bf16 %v1782, %v1781
  %v1797 = vpack.c.bf16 %v1778, %v1777
  %v1798 = vpack.c.bf16 %v1790, %v1789
  %v1799 = vmul.bf16 %v1791, %v631
  %v1800 = vmul.bf16 %v1792, %v638
  %v1801 = vmul.bf16 %v1793, %v645
  %v1802 = vmul.bf16 %v1794, %v652
  %v1803 = vmul.bf16 %v1795, %v631
  %v1804 = vmul.bf16 %v1796, %v638
  %v1805 = vmul.bf16 %v1797, %v645
  %v1806 = vmul.bf16 %v1798, %v652
  %1807 = vrot.lane.b32.xlu0 %v1463, 113
  %v1808 = vpop.permute.xlu0 %1807
  %1809 = vrot.lane.b32.xlu0 %v1467, 113
  %v1810 = vpop.permute.xlu0 %1809
  %1811 = vrot.lane.b32.xlu0 %v1471, 113
  %v1812 = vpop.permute.xlu0 %1811
  %1813 = vrot.lane.b32.xlu0 %v1475, 113
  %v1814 = vpop.permute.xlu0 %1813
  %1815 = vrot.lane.b32.xlu0 %v1464, 113
  %v1816 = vpop.permute.xlu0 %1815
  %1817 = vrot.lane.b32.xlu0 %v1468, 113
  %v1818 = vpop.permute.xlu0 %1817
  %1819 = vrot.lane.b32.xlu0 %v1472, 113
  %v1820 = vpop.permute.xlu0 %1819
  %1821 = vrot.lane.b32.xlu0 %v1476, 113
  %v1822 = vpop.permute.xlu0 %1821
  %1823 = vrot.lane.b32.xlu0 %v1465, 113
  %v1824 = vpop.permute.xlu0 %1823
  %1825 = vrot.lane.b32.xlu0 %v1469, 113
  %v1826 = vpop.permute.xlu0 %1825
  %1827 = vrot.lane.b32.xlu0 %v1473, 113
  %v1828 = vpop.permute.xlu0 %1827
  %1829 = vrot.lane.b32.xlu0 %v1477, 113
  %v1830 = vpop.permute.xlu0 %1829
  %1831 = vrot.lane.b32.xlu0 %v1466, 113
  %v1832 = vpop.permute.xlu0 %1831
  %1833 = vrot.lane.b32.xlu0 %v1470, 113
  %v1834 = vpop.permute.xlu0 %1833
  %1835 = vrot.lane.b32.xlu0 %v1474, 113
  %v1836 = vpop.permute.xlu0 %1835
  %1837 = vrot.lane.b32.xlu0 %v1478, 113
  %v1838 = vpop.permute.xlu0 %1837
  %v1839 = vsel %vm693, %v1824, %v1832
  %v1840 = vsel %vm693, %v1826, %v1834
  %v1841 = vsel %vm693, %v1828, %v1836
  %v1842 = vsel %vm693, %v1830, %v1838
  %v1843 = vsel %vm693, %v1816, %v1824
  %v1844 = vsel %vm693, %v1818, %v1826
  %v1845 = vsel %vm693, %v1820, %v1828
  %v1846 = vsel %vm693, %v1822, %v1830
  %v1847 = vsel %vm693, %v1808, %v1816
  %v1848 = vsel %vm693, %v1810, %v1818
  %v1849 = vsel %vm693, %v1812, %v1820
  %v1850 = vsel %vm693, %v1814, %v1822
  %v1851 = vsel %vm693, %v1832, %v1808
  %v1852 = vsel %vm693, %v1834, %v1810
  %v1853 = vsel %vm693, %v1836, %v1812
  %v1854 = vsel %vm693, %v1838, %v1814
  %v1855 = vpack.c.bf16 %v1848, %v1847
  %v1856 = vpack.c.bf16 %v1844, %v1843
  %v1857 = vpack.c.bf16 %v1840, %v1839
  %v1858 = vpack.c.bf16 %v1852, %v1851
  %v1859 = vpack.c.bf16 %v1850, %v1849
  %v1860 = vpack.c.bf16 %v1846, %v1845
  %v1861 = vpack.c.bf16 %v1842, %v1841
  %v1862 = vpack.c.bf16 %v1854, %v1853
  %v1863 = vmul.bf16 %v1855, %v751
  %v1864 = vmul.bf16 %v1856, %v758
  %v1865 = vmul.bf16 %v1857, %v765
  %v1866 = vmul.bf16 %v1858, %v772
  %v1867 = vmul.bf16 %v1859, %v751
  %v1868 = vmul.bf16 %v1860, %v758
  %v1869 = vmul.bf16 %v1861, %v765
  %v1870 = vmul.bf16 %v1862, %v772
  %1871 = vrot.lane.b32.xlu0 %v1463, 112
  %v1872 = vpop.permute.xlu0 %1871
  %1873 = vrot.lane.b32.xlu0 %v1467, 112
  %v1874 = vpop.permute.xlu0 %1873
  %1875 = vrot.lane.b32.xlu0 %v1471, 112
  %v1876 = vpop.permute.xlu0 %1875
  %1877 = vrot.lane.b32.xlu0 %v1475, 112
  %v1878 = vpop.permute.xlu0 %1877
  %1879 = vrot.lane.b32.xlu0 %v1464, 112
  %v1880 = vpop.permute.xlu0 %1879
  %1881 = vrot.lane.b32.xlu0 %v1468, 112
  %v1882 = vpop.permute.xlu0 %1881
  %1883 = vrot.lane.b32.xlu0 %v1472, 112
  %v1884 = vpop.permute.xlu0 %1883
  %1885 = vrot.lane.b32.xlu0 %v1476, 112
  %v1886 = vpop.permute.xlu0 %1885
  %1887 = vrot.lane.b32.xlu0 %v1465, 112
  %v1888 = vpop.permute.xlu0 %1887
  %1889 = vrot.lane.b32.xlu0 %v1469, 112
  %v1890 = vpop.permute.xlu0 %1889
  %1891 = vrot.lane.b32.xlu0 %v1473, 112
  %v1892 = vpop.permute.xlu0 %1891
  %1893 = vrot.lane.b32.xlu0 %v1477, 112
  %v1894 = vpop.permute.xlu0 %1893
  %1895 = vrot.lane.b32.xlu0 %v1466, 112
  %v1896 = vpop.permute.xlu0 %1895
  %1897 = vrot.lane.b32.xlu0 %v1470, 112
  %v1898 = vpop.permute.xlu0 %1897
  %1899 = vrot.lane.b32.xlu0 %v1474, 112
  %v1900 = vpop.permute.xlu0 %1899
  %1901 = vrot.lane.b32.xlu0 %v1478, 112
  %v1902 = vpop.permute.xlu0 %1901
  %v1903 = vsel %vm813, %v1888, %v1896
  %v1904 = vsel %vm813, %v1890, %v1898
  %v1905 = vsel %vm813, %v1892, %v1900
  %v1906 = vsel %vm813, %v1894, %v1902
  %v1907 = vsel %vm813, %v1880, %v1888
  %v1908 = vsel %vm813, %v1882, %v1890
  %v1909 = vsel %vm813, %v1884, %v1892
  %v1910 = vsel %vm813, %v1886, %v1894
  %v1911 = vsel %vm813, %v1872, %v1880
  %v1912 = vsel %vm813, %v1874, %v1882
  %v1913 = vsel %vm813, %v1876, %v1884
  %v1914 = vsel %vm813, %v1878, %v1886
  %v1915 = vsel %vm813, %v1896, %v1872
  %v1916 = vsel %vm813, %v1898, %v1874
  %v1917 = vsel %vm813, %v1900, %v1876
  %v1918 = vsel %vm813, %v1902, %v1878
  %v1919 = vpack.c.bf16 %v1912, %v1911
  %v1920 = vpack.c.bf16 %v1908, %v1907
  %v1921 = vpack.c.bf16 %v1904, %v1903
  %v1922 = vpack.c.bf16 %v1916, %v1915
  %v1923 = vpack.c.bf16 %v1914, %v1913
  %v1924 = vpack.c.bf16 %v1910, %v1909
  %v1925 = vpack.c.bf16 %v1906, %v1905
  %v1926 = vpack.c.bf16 %v1918, %v1917
  %v1927 = vmul.bf16 %v1919, %v871
  %v1928 = vmul.bf16 %v1920, %v878
  %v1929 = vmul.bf16 %v1921, %v885
  %v1930 = vmul.bf16 %v1922, %v892
  %v1931 = vmul.bf16 %v1923, %v871
  %v1932 = vmul.bf16 %v1924, %v878
  %v1933 = vmul.bf16 %v1925, %v885
  %v1934 = vmul.bf16 %v1926, %v892
  %1935 = vrot.lane.b32.xlu0 %v1463, 111
  %v1936 = vpop.permute.xlu0 %1935
  %1937 = vrot.lane.b32.xlu0 %v1467, 111
  %v1938 = vpop.permute.xlu0 %1937
  %1939 = vrot.lane.b32.xlu0 %v1471, 111
  %v1940 = vpop.permute.xlu0 %1939
  %1941 = vrot.lane.b32.xlu0 %v1475, 111
  %v1942 = vpop.permute.xlu0 %1941
  %1943 = vrot.lane.b32.xlu0 %v1464, 111
  %v1944 = vpop.permute.xlu0 %1943
  %1945 = vrot.lane.b32.xlu0 %v1468, 111
  %v1946 = vpop.permute.xlu0 %1945
  %1947 = vrot.lane.b32.xlu0 %v1472, 111
  %v1948 = vpop.permute.xlu0 %1947
  %1949 = vrot.lane.b32.xlu0 %v1476, 111
  %v1950 = vpop.permute.xlu0 %1949
  %1951 = vrot.lane.b32.xlu0 %v1465, 111
  %v1952 = vpop.permute.xlu0 %1951
  %1953 = vrot.lane.b32.xlu0 %v1469, 111
  %v1954 = vpop.permute.xlu0 %1953
  %1955 = vrot.lane.b32.xlu0 %v1473, 111
  %v1956 = vpop.permute.xlu0 %1955
  %1957 = vrot.lane.b32.xlu0 %v1477, 111
  %v1958 = vpop.permute.xlu0 %1957
  %1959 = vrot.lane.b32.xlu0 %v1466, 111
  %v1960 = vpop.permute.xlu0 %1959
  %1961 = vrot.lane.b32.xlu0 %v1470, 111
  %v1962 = vpop.permute.xlu0 %1961
  %1963 = vrot.lane.b32.xlu0 %v1474, 111
  %v1964 = vpop.permute.xlu0 %1963
  %1965 = vrot.lane.b32.xlu0 %v1478, 111
  %v1966 = vpop.permute.xlu0 %1965
  %v1967 = vsel %vm933, %v1952, %v1960
  %v1968 = vsel %vm933, %v1954, %v1962
  %v1969 = vsel %vm933, %v1956, %v1964
  %v1970 = vsel %vm933, %v1958, %v1966
  %v1971 = vsel %vm933, %v1944, %v1952
  %v1972 = vsel %vm933, %v1946, %v1954
  %v1973 = vsel %vm933, %v1948, %v1956
  %v1974 = vsel %vm933, %v1950, %v1958
  %v1975 = vsel %vm933, %v1936, %v1944
  %v1976 = vsel %vm933, %v1938, %v1946
  %v1977 = vsel %vm933, %v1940, %v1948
  %v1978 = vsel %vm933, %v1942, %v1950
  %v1979 = vsel %vm933, %v1960, %v1936
  %v1980 = vsel %vm933, %v1962, %v1938
  %v1981 = vsel %vm933, %v1964, %v1940
  %v1982 = vsel %vm933, %v1966, %v1942
  %v1983 = vpack.c.bf16 %v1976, %v1975
  %v1984 = vpack.c.bf16 %v1972, %v1971
  %v1985 = vpack.c.bf16 %v1968, %v1967
  %v1986 = vpack.c.bf16 %v1980, %v1979
  %v1987 = vpack.c.bf16 %v1978, %v1977
  %v1988 = vpack.c.bf16 %v1974, %v1973
  %v1989 = vpack.c.bf16 %v1970, %v1969
  %v1990 = vpack.c.bf16 %v1982, %v1981
  %v1991 = vmul.bf16 %v1983, %v991
  %v1992 = vmul.bf16 %v1984, %v998
  %v1993 = vmul.bf16 %v1985, %v1005
  %v1994 = vmul.bf16 %v1986, %v1012
  %v1995 = vmul.bf16 %v1987, %v991
  %v1996 = vmul.bf16 %v1988, %v998
  %v1997 = vmul.bf16 %v1989, %v1005
  %v1998 = vmul.bf16 %v1990, %v1012
  %v1999 = vld [vmem:[%s5] sm:$0xff]
  %v2000 = vld [vmem:[%s5 + $0x8] sm:$0xf]
  %v2001 = vld [vmem:[%s5 + $0xc] sm:$0xff]
  %v2002 = vld [vmem:[%s5 + $0x14] sm:$0xf]
  %v2003 = vld [vmem:[%s5 + $0x18] sm:$0xff]
  %v2004 = vld [vmem:[%s5 + $0x20] sm:$0xf]
  %v2005 = vld [vmem:[%s5 + $0x24] sm:$0xff]
  %v2006 = vld [vmem:[%s5 + $0x2c] sm:$0xf]
  %v2015 = vunpack.c.l.b16 %v1999
  %v2016 = vunpack.c.h.b16 %v1999
  %v2017 = vunpack.c.l.b16 %v2000
  %v2018 = vunpack.c.l.b16 %v2001
  %v2019 = vunpack.c.h.b16 %v2001
  %v2020 = vunpack.c.l.b16 %v2002
  %v2021 = vunpack.c.l.b16 %v2003
  %v2022 = vunpack.c.h.b16 %v2003
  %v2023 = vunpack.c.l.b16 %v2004
  %v2024 = vunpack.c.l.b16 %v2005
  %v2025 = vunpack.c.h.b16 %v2005
  %v2026 = vunpack.c.l.b16 %v2006
  %v2027 = vpack.c.b16 %v2018, %v2015
  %v2028 = vpack.c.b16 %v2019, %v2016
  %v2029 = vpack.c.b16 %v2020, %v2017
  %v2030 = vpack.c.b16 %v2024, %v2021
  %v2031 = vpack.c.b16 %v2025, %v2022
  %v2032 = vpack.c.b16 %v2026, %v2023
  %v2038 = vsel %vm1059, %v2029, 0
  %v2041 = vsel %vm1059, %v2032, 0
  %2043 = vmatprep.subr.bf16.mxu0 %v1732
  %2044 = vmatpush1.bf16.msra.mxu0 %v1731
  %2045 = vmatprep.subr.bf16.mxu0 %v1728
  %2046 = vmatpush1.bf16.msra.mxu0 %v1727
  %2047 = vmatprep.subr.bf16.mxu0 %v1668
  %2048 = vmatpush1.bf16.msra.mxu0 %v1667
  %2049 = vmatprep.subr.bf16.mxu0 %v1664
  %2050 = vmatpush1.bf16.msra.mxu0 %v1663
  %2051 = vmatprep.subr.bf16.mxu0 %v1604
  %2052 = vmatpush1.bf16.msra.mxu0 %v1603
  %2053 = vmatprep.subr.bf16.mxu0 %v1600
  %2054 = vmatpush1.bf16.msra.mxu0 %v1599
  %2055 = vmatprep.subr.bf16.mxu0 %v1540
  %2056 = vmatpush1.bf16.msra.mxu0 %v1539
  %2057 = vmatprep.subr.bf16.mxu0 %v1536
  %2058 = vmatpush1.bf16.msra.mxu0 %v1535
  %2059 = vmatprep.subr.bf16.mxu0 %v1932
  %2060 = vmatpush2.bf16.msra.mxu0 %v1931
  %2061 = vmatprep.subr.bf16.mxu0 %v1928
  %2062 = vmatpush2.bf16.msra.mxu0 %v1927
  %2063 = vmatprep.subr.bf16.mxu0 %v1868
  %2064 = vmatpush2.bf16.msra.mxu0 %v1867
  %2065 = vmatprep.subr.bf16.mxu0 %v1864
  %2066 = vmatpush2.bf16.msra.mxu0 %v1863
  %2067 = vmatprep.subr.bf16.mxu0 %v1804
  %2068 = vmatpush2.bf16.msra.mxu0 %v1803
  %2069 = vmatprep.subr.bf16.mxu0 %v1800
  %2070 = vmatpush2.bf16.msra.mxu0 %v1799
  %2071 = vmatprep.subr.bf16.mxu0 %v1740
  %2072 = vmatpush2.bf16.msra.mxu0 %v1739
  %2073 = vmatprep.subr.bf16.mxu0 %v1736
  %2074 = vmatpush2.bf16.msra.mxu0 %v1735
  %2075 = vmatprep.mubr.bf16.mxu0 %v2028
  %2076 = vmatmul.mubr.bf16.gmra.mxu0 %v2027
  %v2077 = vpop.f32.mrf.mxu0
  %v2078 = vadd.f32 0.0, %v2077
  %v2079 = vpop.f32.mrf.mxu0
  %v2080 = vadd.f32 0.0, %v2079
  %v2081 = vpop.f32.mrf.mxu0
  %v2082 = vadd.f32 0.0, %v2081
  %v2083 = vpop.f32.mrf.mxu0
  %v2084 = vadd.f32 0.0, %v2083
  %2085 = vmatprep.mubr.bf16.mxu0 %v2031
  %2086 = vmatmul.mubr.bf16.gmra.mxu0 %v2030
  %v2087 = vpop.f32.mrf.mxu0
  %v2088 = vadd.f32 0.0, %v2087
  %v2089 = vpop.f32.mrf.mxu0
  %v2090 = vadd.f32 0.0, %v2089
  %v2091 = vpop.f32.mrf.mxu0
  %v2092 = vadd.f32 0.0, %v2091
  %v2093 = vpop.f32.mrf.mxu0
  %v2094 = vadd.f32 0.0, %v2093
  %2095 = vdwg.mxu0
  %2096 = vmatprep.subr.bf16.mxu0 0
  %2097 = vmatpush1.bf16.msra.mxu0 0
  %2098 = vmatprep.subr.bf16.mxu0 0
  %2099 = vmatpush1.bf16.msra.mxu0 0
  %2100 = vmatprep.subr.bf16.mxu0 0
  %2101 = vmatpush1.bf16.msra.mxu0 0
  %2102 = vmatprep.subr.bf16.mxu0 0
  %2103 = vmatpush1.bf16.msra.mxu0 0
  %2104 = vmatprep.subr.bf16.mxu0 0
  %2105 = vmatpush1.bf16.msra.mxu0 0
  %2106 = vmatprep.subr.bf16.mxu0 0
  %2107 = vmatpush1.bf16.msra.mxu0 0
  %2108 = vmatprep.subr.bf16.mxu0 %v1996
  %2109 = vmatpush1.bf16.msra.mxu0 %v1995
  %2110 = vmatprep.subr.bf16.mxu0 %v1992
  %2111 = vmatpush1.bf16.msra.mxu0 %v1991
  %2112 = vmatprep.subr.bf16.mxu0 0
  %2113 = vmatpush2.bf16.msra.mxu0 0
  %2114 = vmatprep.subr.bf16.mxu0 0
  %2115 = vmatpush2.bf16.msra.mxu0 0
  %2116 = vmatprep.subr.bf16.mxu0 0
  %2117 = vmatpush2.bf16.msra.mxu0 0
  %2118 = vmatprep.subr.bf16.mxu0 0
  %2119 = vmatpush2.bf16.msra.mxu0 0
  %2120 = vmatprep.subr.bf16.mxu0 0
  %2121 = vmatpush2.bf16.msra.mxu0 0
  %2122 = vmatprep.subr.bf16.mxu0 0
  %2123 = vmatpush2.bf16.msra.mxu0 0
  %2124 = vmatprep.subr.bf16.mxu0 0
  %2125 = vmatpush2.bf16.msra.mxu0 0
  %2126 = vmatprep.subr.bf16.mxu0 0
  %2127 = vmatpush2.bf16.msra.mxu0 0
  %2128 = vmatprep.mubr.bf16.mxu0 0
  %2129 = vmatmul.mubr.bf16.gmra.mxu0 %v2038
  %v2130 = vpop.f32.mrf.mxu0
  %v2131 = vadd.f32 %v2078, %v2130
  %v2132 = vpop.f32.mrf.mxu0
  %v2133 = vadd.f32 %v2080, %v2132
  %v2134 = vpop.f32.mrf.mxu0
  %v2135 = vadd.f32 %v2082, %v2134
  %v2136 = vpop.f32.mrf.mxu0
  %v2137 = vadd.f32 %v2084, %v2136
  %2138 = vmatprep.mubr.bf16.mxu0 0
  %2139 = vmatmul.mubr.bf16.gmra.mxu0 %v2041
  %v2140 = vpop.f32.mrf.mxu0
  %v2141 = vadd.f32 %v2088, %v2140
  %v2142 = vpop.f32.mrf.mxu0
  %v2143 = vadd.f32 %v2090, %v2142
  %v2144 = vpop.f32.mrf.mxu0
  %v2145 = vadd.f32 %v2092, %v2144
  %v2146 = vpop.f32.mrf.mxu0
  %v2147 = vadd.f32 %v2094, %v2146
  %2148 = vdwg.mxu0
  %2149 = vmatprep.subr.bf16.mxu0 %v1734
  %2150 = vmatpush1.bf16.msra.mxu0 %v1733
  %2151 = vmatprep.subr.bf16.mxu0 %v1730
  %2152 = vmatpush1.bf16.msra.mxu0 %v1729
  %2153 = vmatprep.subr.bf16.mxu0 %v1670
  %2154 = vmatpush1.bf16.msra.mxu0 %v1669
  %2155 = vmatprep.subr.bf16.mxu0 %v1666
  %2156 = vmatpush1.bf16.msra.mxu0 %v1665
  %2157 = vmatprep.subr.bf16.mxu0 %v1606
  %2158 = vmatpush1.bf16.msra.mxu0 %v1605
  %2159 = vmatprep.subr.bf16.mxu0 %v1602
  %2160 = vmatpush1.bf16.msra.mxu0 %v1601
  %2161 = vmatprep.subr.bf16.mxu0 %v1542
  %2162 = vmatpush1.bf16.msra.mxu0 %v1541
  %2163 = vmatprep.subr.bf16.mxu0 %v1538
  %2164 = vmatpush1.bf16.msra.mxu0 %v1537
  %2165 = vmatprep.subr.bf16.mxu0 %v1934
  %2166 = vmatpush2.bf16.msra.mxu0 %v1933
  %2167 = vmatprep.subr.bf16.mxu0 %v1930
  %2168 = vmatpush2.bf16.msra.mxu0 %v1929
  %2169 = vmatprep.subr.bf16.mxu0 %v1870
  %2170 = vmatpush2.bf16.msra.mxu0 %v1869
  %2171 = vmatprep.subr.bf16.mxu0 %v1866
  %2172 = vmatpush2.bf16.msra.mxu0 %v1865
  %2173 = vmatprep.subr.bf16.mxu0 %v1806
  %2174 = vmatpush2.bf16.msra.mxu0 %v1805
  %2175 = vmatprep.subr.bf16.mxu0 %v1802
  %2176 = vmatpush2.bf16.msra.mxu0 %v1801
  %2177 = vmatprep.subr.bf16.mxu0 %v1742
  %2178 = vmatpush2.bf16.msra.mxu0 %v1741
  %2179 = vmatprep.subr.bf16.mxu0 %v1738
  %2180 = vmatpush2.bf16.msra.mxu0 %v1737
  %2181 = vmatprep.mubr.bf16.mxu0 %v2028
  %2182 = vmatmul.mubr.bf16.gmra.mxu0 %v2027
  %v2183 = vpop.f32.mrf.mxu0
  %v2184 = vadd.f32 0.0, %v2183
  %v2185 = vpop.f32.mrf.mxu0
  %v2186 = vadd.f32 0.0, %v2185
  %v2187 = vpop.f32.mrf.mxu0
  %v2188 = vadd.f32 0.0, %v2187
  %v2189 = vpop.f32.mrf.mxu0
  %v2190 = vadd.f32 0.0, %v2189
  %2191 = vmatprep.mubr.bf16.mxu0 %v2031
  %2192 = vmatmul.mubr.bf16.gmra.mxu0 %v2030
  %v2193 = vpop.f32.mrf.mxu0
  %v2194 = vadd.f32 0.0, %v2193
  %v2195 = vpop.f32.mrf.mxu0
  %v2196 = vadd.f32 0.0, %v2195
  %v2197 = vpop.f32.mrf.mxu0
  %v2198 = vadd.f32 0.0, %v2197
  %v2199 = vpop.f32.mrf.mxu0
  %v2200 = vadd.f32 0.0, %v2199
  %2201 = vdwg.mxu0
  %2202 = vmatprep.subr.bf16.mxu0 0
  %2203 = vmatpush1.bf16.msra.mxu0 0
  %2204 = vmatprep.subr.bf16.mxu0 0
  %2205 = vmatpush1.bf16.msra.mxu0 0
  %2206 = vmatprep.subr.bf16.mxu0 0
  %2207 = vmatpush1.bf16.msra.mxu0 0
  %2208 = vmatprep.subr.bf16.mxu0 0
  %2209 = vmatpush1.bf16.msra.mxu0 0
  %2210 = vmatprep.subr.bf16.mxu0 0
  %2211 = vmatpush1.bf16.msra.mxu0 0
  %2212 = vmatprep.subr.bf16.mxu0 0
  %2213 = vmatpush1.bf16.msra.mxu0 0
  %2214 = vmatprep.subr.bf16.mxu0 %v1998
  %2215 = vmatpush1.bf16.msra.mxu0 %v1997
  %2216 = vmatprep.subr.bf16.mxu0 %v1994
  %2217 = vmatpush1.bf16.msra.mxu0 %v1993
  %2218 = vmatprep.subr.bf16.mxu0 0
  %2219 = vmatpush2.bf16.msra.mxu0 0
  %2220 = vmatprep.subr.bf16.mxu0 0
  %2221 = vmatpush2.bf16.msra.mxu0 0
  %2222 = vmatprep.subr.bf16.mxu0 0
  %2223 = vmatpush2.bf16.msra.mxu0 0
  %2224 = vmatprep.subr.bf16.mxu0 0
  %2225 = vmatpush2.bf16.msra.mxu0 0
  %2226 = vmatprep.subr.bf16.mxu0 0
  %2227 = vmatpush2.bf16.msra.mxu0 0
  %2228 = vmatprep.subr.bf16.mxu0 0
  %2229 = vmatpush2.bf16.msra.mxu0 0
  %2230 = vmatprep.subr.bf16.mxu0 0
  %2231 = vmatpush2.bf16.msra.mxu0 0
  %2232 = vmatprep.subr.bf16.mxu0 0
  %2233 = vmatpush2.bf16.msra.mxu0 0
  %2234 = vmatprep.mubr.bf16.mxu0 0
  %2235 = vmatmul.mubr.bf16.gmra.mxu0 %v2038
  %v2236 = vpop.f32.mrf.mxu0
  %v2237 = vadd.f32 %v2184, %v2236
  %v2238 = vpop.f32.mrf.mxu0
  %v2239 = vadd.f32 %v2186, %v2238
  %v2240 = vpop.f32.mrf.mxu0
  %v2241 = vadd.f32 %v2188, %v2240
  %v2242 = vpop.f32.mrf.mxu0
  %v2243 = vadd.f32 %v2190, %v2242
  %2244 = vmatprep.mubr.bf16.mxu0 0
  %2245 = vmatmul.mubr.bf16.gmra.mxu0 %v2041
  %v2246 = vpop.f32.mrf.mxu0
  %v2247 = vadd.f32 %v2194, %v2246
  %v2248 = vpop.f32.mrf.mxu0
  %v2249 = vadd.f32 %v2196, %v2248
  %v2250 = vpop.f32.mrf.mxu0
  %v2251 = vadd.f32 %v2198, %v2250
  %v2252 = vpop.f32.mrf.mxu0
  %v2253 = vadd.f32 %v2200, %v2252
  %2254 = vdwg.mxu0
  %v2255 = vadd.f32 %v2131, %v2133
  %v2256 = vadd.f32 %v2255, %v2237
  %v2257 = vadd.f32 %v2256, %v2239
  %2258 = vadd.xlane.f32.xlu0 %v2257
  %v2259 = vpop.xlane.xlu0 %2258
  %v2260 = vadd.f32 %v2135, %v2137
  %v2261 = vadd.f32 %v2260, %v2241
  %v2262 = vadd.f32 %v2261, %v2243
  %2263 = vadd.xlane.f32.xlu0 %v2262
  %v2264 = vpop.xlane.xlu0 %2263
  %v2265 = vadd.f32 %v2141, %v2143
  %v2266 = vadd.f32 %v2265, %v2247
  %v2267 = vadd.f32 %v2266, %v2249
  %2268 = vadd.xlane.f32.xlu0 %v2267
  %v2269 = vpop.xlane.xlu0 %2268
  %v2270 = vadd.f32 %v2145, %v2147
  %v2271 = vadd.f32 %v2270, %v2251
  %v2272 = vadd.f32 %v2271, %v2253
  %2273 = vadd.xlane.f32.xlu0 %v2272
  %v2274 = vpop.xlane.xlu0 %2273
  %v2275 = vmul.f32 %v2259, %v1298
  %v2276 = vmul.f32 %v2264, %v1298
  %v2277 = vmul.f32 %v2269, %v1298
  %v2278 = vmul.f32 %v2274, %v1298
  %v2279 = vsub.f32 %v2131, %v2275
  %v2280 = vsub.f32 %v2133, %v2275
  %v2281 = vsub.f32 %v2237, %v2275
  %v2282 = vsub.f32 %v2239, %v2275
  %v2283 = vsub.f32 %v2135, %v2276
  %v2284 = vsub.f32 %v2137, %v2276
  %v2285 = vsub.f32 %v2241, %v2276
  %v2286 = vsub.f32 %v2243, %v2276
  %v2287 = vsub.f32 %v2141, %v2277
  %v2288 = vsub.f32 %v2143, %v2277
  %v2289 = vsub.f32 %v2247, %v2277
  %v2290 = vsub.f32 %v2249, %v2277
  %v2291 = vsub.f32 %v2145, %v2278
  %v2292 = vsub.f32 %v2147, %v2278
  %v2293 = vsub.f32 %v2251, %v2278
  %v2294 = vsub.f32 %v2253, %v2278
  %v2295 = vmul.f32 %v2279, %v2279
  %v2296 = vmul.f32 %v2280, %v2280
  %v2297 = vmul.f32 %v2281, %v2281
  %v2298 = vmul.f32 %v2282, %v2282
  %v2299 = vmul.f32 %v2283, %v2283
  %v2300 = vmul.f32 %v2284, %v2284
  %v2301 = vmul.f32 %v2285, %v2285
  %v2302 = vmul.f32 %v2286, %v2286
  %v2303 = vmul.f32 %v2287, %v2287
  %v2304 = vmul.f32 %v2288, %v2288
  %v2305 = vmul.f32 %v2289, %v2289
  %v2306 = vmul.f32 %v2290, %v2290
  %v2307 = vmul.f32 %v2291, %v2291
  %v2308 = vmul.f32 %v2292, %v2292
  %v2309 = vmul.f32 %v2293, %v2293
  %v2310 = vmul.f32 %v2294, %v2294
  %v2311 = vadd.f32 %v2295, %v2296
  %v2312 = vadd.f32 %v2311, %v2297
  %v2313 = vadd.f32 %v2312, %v2298
  %2314 = vadd.xlane.f32.xlu0 %v2313
  %v2315 = vpop.xlane.xlu0 %2314
  %v2316 = vadd.f32 %v2299, %v2300
  %v2317 = vadd.f32 %v2316, %v2301
  %v2318 = vadd.f32 %v2317, %v2302
  %2319 = vadd.xlane.f32.xlu0 %v2318
  %v2320 = vpop.xlane.xlu0 %2319
  %v2321 = vadd.f32 %v2303, %v2304
  %v2322 = vadd.f32 %v2321, %v2305
  %v2323 = vadd.f32 %v2322, %v2306
  %2324 = vadd.xlane.f32.xlu0 %v2323
  %v2325 = vpop.xlane.xlu0 %2324
  %v2326 = vadd.f32 %v2307, %v2308
  %v2327 = vadd.f32 %v2326, %v2309
  %v2328 = vadd.f32 %v2327, %v2310
  %2329 = vadd.xlane.f32.xlu0 %v2328
  %v2330 = vpop.xlane.xlu0 %2329
  %v2331 = vmul.f32 %v2315, %v1298
  %v2332 = vmul.f32 %v2320, %v1298
  %v2333 = vmul.f32 %v2325, %v1298
  %v2334 = vmul.f32 %v2330, %v1298
  %v2335 = vadd.f32 %v2331, 1e-05
  %v2336 = vadd.f32 %v2332, 1e-05
  %v2337 = vadd.f32 %v2333, 1e-05
  %v2338 = vadd.f32 %v2334, 1e-05
  %v2339 = vrsqrt.pop %v2335
  %v2340 = vrsqrt.pop %v2336
  %v2341 = vrsqrt.pop %v2337
  %v2342 = vrsqrt.pop %v2338
  %v2343 = vmul.f32 %v2279, %v2339
  %v2344 = vmul.f32 %v2280, %v2339
  %v2345 = vmul.f32 %v2281, %v2339
  %v2346 = vmul.f32 %v2282, %v2339
  %v2347 = vmul.f32 %v2283, %v2340
  %v2348 = vmul.f32 %v2284, %v2340
  %v2349 = vmul.f32 %v2285, %v2340
  %v2350 = vmul.f32 %v2286, %v2340
  %v2351 = vmul.f32 %v2287, %v2341
  %v2352 = vmul.f32 %v2288, %v2341
  %v2353 = vmul.f32 %v2289, %v2341
  %v2354 = vmul.f32 %v2290, %v2341
  %v2355 = vmul.f32 %v2291, %v2342
  %v2356 = vmul.f32 %v2292, %v2342
  %v2357 = vmul.f32 %v2293, %v2342
  %v2358 = vmul.f32 %v2294, %v2342
  %v2359 = vld [vmem:[%s6] sm:$0xff]
  %v2360 = vld [vmem:[%s6 + $0x8] sm:$0xff]
  %v2361 = vld [vmem:[%s6 + $0x10] sm:$0xff]
  %v2362 = vld [vmem:[%s6 + $0x18] sm:$0xff]
  %2364 = vset.pattern.permute.xlu0 0
  %2365 = vperm.xlu0 %2364, %v2359
  %v2366 = vpop.permute.xlu0 %2365
  %2369 = vset.pattern.permute.xlu0 0
  %2370 = vperm.xlu0 %2369, %v2360
  %v2371 = vpop.permute.xlu0 %2370
  %2374 = vset.pattern.permute.xlu0 0
  %2375 = vperm.xlu0 %2374, %v2361
  %v2376 = vpop.permute.xlu0 %2375
  %2379 = vset.pattern.permute.xlu0 0
  %2380 = vperm.xlu0 %2379, %v2362
  %v2381 = vpop.permute.xlu0 %2380
  %v2383 = vmul.f32 %v2343, %v2366
  %v2384 = vmul.f32 %v2344, %v2366
  %v2385 = vmul.f32 %v2345, %v2366
  %v2386 = vmul.f32 %v2346, %v2366
  %v2387 = vmul.f32 %v2347, %v2371
  %v2388 = vmul.f32 %v2348, %v2371
  %v2389 = vmul.f32 %v2349, %v2371
  %v2390 = vmul.f32 %v2350, %v2371
  %v2391 = vmul.f32 %v2351, %v2376
  %v2392 = vmul.f32 %v2352, %v2376
  %v2393 = vmul.f32 %v2353, %v2376
  %v2394 = vmul.f32 %v2354, %v2376
  %v2395 = vmul.f32 %v2355, %v2381
  %v2396 = vmul.f32 %v2356, %v2381
  %v2397 = vmul.f32 %v2357, %v2381
  %v2398 = vmul.f32 %v2358, %v2381
  %v2399 = vld [vmem:[%s7] sm:$0xff]
  %v2400 = vld [vmem:[%s7 + $0x8] sm:$0xff]
  %v2401 = vld [vmem:[%s7 + $0x10] sm:$0xff]
  %v2402 = vld [vmem:[%s7 + $0x18] sm:$0xff]
  %2404 = vset.pattern.permute.xlu0 0
  %2405 = vperm.xlu0 %2404, %v2399
  %v2406 = vpop.permute.xlu0 %2405
  %2409 = vset.pattern.permute.xlu0 0
  %2410 = vperm.xlu0 %2409, %v2400
  %v2411 = vpop.permute.xlu0 %2410
  %2414 = vset.pattern.permute.xlu0 0
  %2415 = vperm.xlu0 %2414, %v2401
  %v2416 = vpop.permute.xlu0 %2415
  %2419 = vset.pattern.permute.xlu0 0
  %2420 = vperm.xlu0 %2419, %v2402
  %v2421 = vpop.permute.xlu0 %2420
  %v2423 = vadd.f32 %v2383, %v2406
  %v2424 = vadd.f32 %v2384, %v2406
  %v2425 = vadd.f32 %v2385, %v2406
  %v2426 = vadd.f32 %v2386, %v2406
  %v2427 = vadd.f32 %v2387, %v2411
  %v2428 = vadd.f32 %v2388, %v2411
  %v2429 = vadd.f32 %v2389, %v2411
  %v2430 = vadd.f32 %v2390, %v2411
  %v2431 = vadd.f32 %v2391, %v2416
  %v2432 = vadd.f32 %v2392, %v2416
  %v2433 = vadd.f32 %v2393, %v2416
  %v2434 = vadd.f32 %v2394, %v2416
  %v2435 = vadd.f32 %v2395, %v2421
  %v2436 = vadd.f32 %v2396, %v2421
  %v2437 = vadd.f32 %v2397, %v2421
  %v2438 = vadd.f32 %v2398, %v2421
  %v2439 = vadd.f32 %v2423, %v2424
  %2440 = vadd.xlane.f32.xlu0 %v2439
  %v2441 = vpop.xlane.xlu0 %2440
  %v2442 = vadd.f32 %v2427, %v2428
  %2443 = vadd.xlane.f32.xlu0 %v2442
  %v2444 = vpop.xlane.xlu0 %2443
  %v2445 = vadd.f32 %v2431, %v2432
  %2446 = vadd.xlane.f32.xlu0 %v2445
  %v2447 = vpop.xlane.xlu0 %2446
  %v2448 = vadd.f32 %v2435, %v2436
  %2449 = vadd.xlane.f32.xlu0 %v2448
  %v2450 = vpop.xlane.xlu0 %2449
  %v2451 = vrcp.pop 256.0
  %v2452 = vmul.f32 %v2441, %v2451
  %v2453 = vmul.f32 %v2444, %v2451
  %v2454 = vmul.f32 %v2447, %v2451
  %v2455 = vmul.f32 %v2450, %v2451
  %v2456 = vadd.f32 %v2425, %v2426
  %2457 = vadd.xlane.f32.xlu0 %v2456
  %v2458 = vpop.xlane.xlu0 %2457
  %v2459 = vadd.f32 %v2429, %v2430
  %2460 = vadd.xlane.f32.xlu0 %v2459
  %v2461 = vpop.xlane.xlu0 %2460
  %v2462 = vadd.f32 %v2433, %v2434
  %2463 = vadd.xlane.f32.xlu0 %v2462
  %v2464 = vpop.xlane.xlu0 %2463
  %v2465 = vadd.f32 %v2437, %v2438
  %2466 = vadd.xlane.f32.xlu0 %v2465
  %v2467 = vpop.xlane.xlu0 %2466
  %v2468 = vmul.f32 %v2458, %v2451
  %v2469 = vmul.f32 %v2461, %v2451
  %v2470 = vmul.f32 %v2464, %v2451
  %v2471 = vmul.f32 %v2467, %v2451
  %v2472 = vmax.f32 %v2423, %v2424
  %2473 = vmax.xlane.f32.xlu0 %v2472
  %v2474 = vpop.xlane.xlu0 %2473
  %v2475 = vmax.f32 %v2427, %v2428
  %2476 = vmax.xlane.f32.xlu0 %v2475
  %v2477 = vpop.xlane.xlu0 %2476
  %v2478 = vmax.f32 %v2431, %v2432
  %2479 = vmax.xlane.f32.xlu0 %v2478
  %v2480 = vpop.xlane.xlu0 %2479
  %v2481 = vmax.f32 %v2435, %v2436
  %2482 = vmax.xlane.f32.xlu0 %v2481
  %v2483 = vpop.xlane.xlu0 %2482
  %v2484 = vmax.f32 %v2425, %v2426
  %2485 = vmax.xlane.f32.xlu0 %v2484
  %v2486 = vpop.xlane.xlu0 %2485
  %v2487 = vmax.f32 %v2429, %v2430
  %2488 = vmax.xlane.f32.xlu0 %v2487
  %v2489 = vpop.xlane.xlu0 %2488
  %v2490 = vmax.f32 %v2433, %v2434
  %2491 = vmax.xlane.f32.xlu0 %v2490
  %v2492 = vpop.xlane.xlu0 %2491
  %v2493 = vmax.f32 %v2437, %v2438
  %2494 = vmax.xlane.f32.xlu0 %v2493
  %v2495 = vpop.xlane.xlu0 %2494
  %vm2496 = vcmask 7168
  %v2497 = vsel %vm2496, %v2452, %v2468
  %v2498 = vsel %vm2496, %v2453, %v2469
  %v2499 = vsel %vm2496, %v2454, %v2470
  %v2500 = vsel %vm2496, %v2455, %v2471
  %vm2501 = vcmask 15360
  %v2502 = vsel %vm2501, %v2497, %v2474
  %v2503 = vsel %vm2501, %v2498, %v2477
  %v2504 = vsel %vm2501, %v2499, %v2480
  %v2505 = vsel %vm2501, %v2500, %v2483
  %vm2506 = vcmask 23552
  %v2507 = vsel %vm2506, %v2502, %v2486
  %v2508 = vsel %vm2506, %v2503, %v2489
  %v2509 = vsel %vm2506, %v2504, %v2492
  %v2510 = vsel %vm2506, %v2505, %v2495
  %v2511 = vld [vmem:[%s8] sm:$0xff]
  %v2513 = vsel %vm1059, %v2511, 0
  %2515 = vmatprep.subr.mxu0 0.0
  %2516 = vmatpush1.msra.mxu0 0.0
  %2517 = vmatprep.subr.mxu0 0.0
  %2518 = vmatpush1.msra.mxu0 0.0
  %2519 = vmatprep.subr.mxu0 0.0
  %2520 = vmatpush1.msra.mxu0 0.0
  %2521 = vmatprep.subr.mxu0 0.0
  %2522 = vmatpush1.msra.mxu0 0.0
  %2523 = vmatprep.subr.mxu0 0.0
  %2524 = vmatpush1.msra.mxu0 0.0
  %2525 = vmatprep.subr.mxu0 0.0
  %2526 = vmatpush1.msra.mxu0 0.0
  %2527 = vmatprep.subr.mxu0 0.0
  %2528 = vmatpush1.msra.mxu0 0.0
  %2529 = vmatprep.subr.mxu0 0.0
  %2530 = vmatpush1.msra.mxu0 0.0
  %2531 = vmatprep.subr.mxu0 0.0
  %2532 = vmatpush1.msra.mxu0 0.0
  %2533 = vmatprep.subr.mxu0 0.0
  %2534 = vmatpush1.msra.mxu0 0.0
  %2535 = vmatprep.subr.mxu0 0.0
  %2536 = vmatpush1.msra.mxu0 0.0
  %2537 = vmatprep.subr.mxu0 0.0
  %2538 = vmatpush1.msra.mxu0 0.0
  %2539 = vmatprep.subr.mxu0 0.0
  %2540 = vmatpush1.msra.mxu0 %v2510
  %2541 = vmatprep.subr.mxu0 0.0
  %2542 = vmatpush1.msra.mxu0 %v2509
  %2543 = vmatprep.subr.mxu0 0.0
  %2544 = vmatpush1.msra.mxu0 %v2508
  %2545 = vmatprep.subr.mxu0 0.0
  %2546 = vmatpush1.msra.mxu0 %v2507
  %2547 = vmatprep.subr.mxu0 0.0
  %2548 = vmatpush2.msra.mxu0 0.0
  %2549 = vmatprep.subr.mxu0 0.0
  %2550 = vmatpush2.msra.mxu0 0.0
  %2551 = vmatprep.subr.mxu0 0.0
  %2552 = vmatpush2.msra.mxu0 0.0
  %2553 = vmatprep.subr.mxu0 0.0
  %2554 = vmatpush2.msra.mxu0 0.0
  %2555 = vmatprep.subr.mxu0 0.0
  %2556 = vmatpush2.msra.mxu0 0.0
  %2557 = vmatprep.subr.mxu0 0.0
  %2558 = vmatpush2.msra.mxu0 0.0
  %2559 = vmatprep.subr.mxu0 0.0
  %2560 = vmatpush2.msra.mxu0 0.0
  %2561 = vmatprep.subr.mxu0 0.0
  %2562 = vmatpush2.msra.mxu0 0.0
  %2563 = vmatprep.subr.mxu0 0.0
  %2564 = vmatpush2.msra.mxu0 0.0
  %2565 = vmatprep.subr.mxu0 0.0
  %2566 = vmatpush2.msra.mxu0 0.0
  %2567 = vmatprep.subr.mxu0 0.0
  %2568 = vmatpush2.msra.mxu0 0.0
  %2569 = vmatprep.subr.mxu0 0.0
  %2570 = vmatpush2.msra.mxu0 0.0
  %2571 = vmatprep.subr.mxu0 0.0
  %2572 = vmatpush2.msra.mxu0 0.0
  %2573 = vmatprep.subr.mxu0 0.0
  %2574 = vmatpush2.msra.mxu0 0.0
  %2575 = vmatprep.subr.mxu0 0.0
  %2576 = vmatpush2.msra.mxu0 0.0
  %2577 = vmatprep.subr.mxu0 0.0
  %2578 = vmatpush2.msra.mxu0 0.0
  %2579 = vmatprep.mubr.f32.mxu0 0.0
  %2580 = vmatmul.mubr.f32.gmra.mxu0 %v2513
  %v2581 = vpop.f32.mrf.mxu0
  %v2582 = vadd.f32 0.0, %v2581
  %v2583 = vpop.f32.mrf.mxu0
  %2584 = vdwg.mxu0
  %v2585 = vmax.f32 %v2582, 0.0
  %v2586 = vld [vmem:[%s9] sm:$0xff]
  %v2587 = vld [vmem:[%s9 + $0x8] sm:$0xff]
  %v2588 = vld [vmem:[%s9 + $0x10] sm:$0xff]
  %v2589 = vld [vmem:[%s9 + $0x18] sm:$0xff]
  %vm2590 = vcmask 64512
  %v2592 = vsel %vm2590, %v2586, 0
  %v2595 = vsel %vm2590, %v2587, 0
  %v2598 = vsel %vm2590, %v2588, 0
  %v2601 = vsel %vm2590, %v2589, 0
  %2603 = vmatprep.subr.mxu0 0.0
  %2604 = vmatpush1.msra.mxu0 0.0
  %2605 = vmatprep.subr.mxu0 0.0
  %2606 = vmatpush1.msra.mxu0 0.0
  %2607 = vmatprep.subr.mxu0 0.0
  %2608 = vmatpush1.msra.mxu0 0.0
  %2609 = vmatprep.subr.mxu0 0.0
  %2610 = vmatpush1.msra.mxu0 0.0
  %2611 = vmatprep.subr.mxu0 0.0
  %2612 = vmatpush1.msra.mxu0 0.0
  %2613 = vmatprep.subr.mxu0 0.0
  %2614 = vmatpush1.msra.mxu0 0.0
  %2615 = vmatprep.subr.mxu0 0.0
  %2616 = vmatpush1.msra.mxu0 0.0
  %2617 = vmatprep.subr.mxu0 0.0
  %2618 = vmatpush1.msra.mxu0 0.0
  %2619 = vmatprep.subr.mxu0 0.0
  %2620 = vmatpush1.msra.mxu0 0.0
  %2621 = vmatprep.subr.mxu0 0.0
  %2622 = vmatpush1.msra.mxu0 0.0
  %2623 = vmatprep.subr.mxu0 0.0
  %2624 = vmatpush1.msra.mxu0 0.0
  %2625 = vmatprep.subr.mxu0 0.0
  %2626 = vmatpush1.msra.mxu0 0.0
  %2627 = vmatprep.subr.mxu0 0.0
  %2628 = vmatpush1.msra.mxu0 0.0
  %2629 = vmatprep.subr.mxu0 0.0
  %2630 = vmatpush1.msra.mxu0 0.0
  %2631 = vmatprep.subr.mxu0 0.0
  %2632 = vmatpush1.msra.mxu0 0.0
  %2633 = vmatprep.subr.mxu0 0.0
  %2634 = vmatpush1.msra.mxu0 %v2585
  %2635 = vmatprep.subr.mxu0 0.0
  %2636 = vmatpush2.msra.mxu0 0.0
  %2637 = vmatprep.subr.mxu0 0.0
  %2638 = vmatpush2.msra.mxu0 0.0
  %2639 = vmatprep.subr.mxu0 0.0
  %2640 = vmatpush2.msra.mxu0 0.0
  %2641 = vmatprep.subr.mxu0 0.0
  %2642 = vmatpush2.msra.mxu0 0.0
  %2643 = vmatprep.subr.mxu0 0.0
  %2644 = vmatpush2.msra.mxu0 0.0
  %2645 = vmatprep.subr.mxu0 0.0
  %2646 = vmatpush2.msra.mxu0 0.0
  %2647 = vmatprep.subr.mxu0 0.0
  %2648 = vmatpush2.msra.mxu0 0.0
  %2649 = vmatprep.subr.mxu0 0.0
  %2650 = vmatpush2.msra.mxu0 0.0
  %2651 = vmatprep.subr.mxu0 0.0
  %2652 = vmatpush2.msra.mxu0 0.0
  %2653 = vmatprep.subr.mxu0 0.0
  %2654 = vmatpush2.msra.mxu0 0.0
  %2655 = vmatprep.subr.mxu0 0.0
  %2656 = vmatpush2.msra.mxu0 0.0
  %2657 = vmatprep.subr.mxu0 0.0
  %2658 = vmatpush2.msra.mxu0 0.0
  %2659 = vmatprep.subr.mxu0 0.0
  %2660 = vmatpush2.msra.mxu0 0.0
  %2661 = vmatprep.subr.mxu0 0.0
  %2662 = vmatpush2.msra.mxu0 0.0
  %2663 = vmatprep.subr.mxu0 0.0
  %2664 = vmatpush2.msra.mxu0 0.0
  %2665 = vmatprep.subr.mxu0 0.0
  %2666 = vmatpush2.msra.mxu0 0.0
  %2667 = vmatprep.mubr.f32.mxu0 0.0
  %2668 = vmatmul.mubr.f32.gmra.mxu0 %v2592
  %v2669 = vpop.f32.mrf.mxu0
  %v2670 = vadd.f32 0.0, %v2669
  %v2671 = vpop.f32.mrf.mxu0
  %2672 = vmatprep.mubr.f32.mxu0 0.0
  %2673 = vmatmul.mubr.f32.gmra.mxu0 %v2595
  %v2674 = vpop.f32.mrf.mxu0
  %v2675 = vadd.f32 0.0, %v2674
  %v2676 = vpop.f32.mrf.mxu0
  %2677 = vmatprep.mubr.f32.mxu0 0.0
  %2678 = vmatmul.mubr.f32.gmra.mxu0 %v2598
  %v2679 = vpop.f32.mrf.mxu0
  %v2680 = vadd.f32 0.0, %v2679
  %v2681 = vpop.f32.mrf.mxu0
  %2682 = vmatprep.mubr.f32.mxu0 0.0
  %2683 = vmatmul.mubr.f32.gmra.mxu0 %v2601
  %v2684 = vpop.f32.mrf.mxu0
  %v2685 = vadd.f32 0.0, %v2684
  %v2686 = vpop.f32.mrf.mxu0
  %2687 = vdwg.mxu0
  %2692 = vrot.lane.b32.xlu0 %v2670, 126
  %v2693 = vpop.permute.xlu0 %2692
  %2694 = vrot.lane.b32.xlu0 %v2675, 126
  %v2695 = vpop.permute.xlu0 %2694
  %2696 = vrot.lane.b32.xlu0 %v2680, 126
  %v2697 = vpop.permute.xlu0 %2696
  %2698 = vrot.lane.b32.xlu0 %v2685, 126
  %v2699 = vpop.permute.xlu0 %2698
  %v2704 = vadd.f32 %v2670, %v2693
  %v2705 = vadd.f32 %v2675, %v2695
  %v2706 = vadd.f32 %v2680, %v2697
  %v2707 = vadd.f32 %v2685, %v2699
  %v2708 = vxor.u32 %v2704, 2147483648
  %v2709 = vxor.u32 %v2705, 2147483648
  %v2710 = vxor.u32 %v2706, 2147483648
  %v2711 = vxor.u32 %v2707, 2147483648
  %v2712 = vmul.f32 %v2708, 1.442695
  %v2713 = vpow.pop %v2712
  %v2714 = vmul.f32 %v2709, 1.442695
  %v2715 = vpow.pop %v2714
  %v2716 = vmul.f32 %v2710, 1.442695
  %v2717 = vpow.pop %v2716
  %v2718 = vmul.f32 %v2711, 1.442695
  %v2719 = vpow.pop %v2718
  %v2720 = vadd.f32 %v2713, 1.0
  %v2721 = vadd.f32 %v2715, 1.0
  %v2722 = vadd.f32 %v2717, 1.0
  %v2723 = vadd.f32 %v2719, 1.0
  %v2724 = vrcp.pop %v2720
  %v2725 = vmul.f32 1.0, %v2724
  %v2726 = vrcp.pop %v2721
  %v2727 = vmul.f32 1.0, %v2726
  %v2728 = vrcp.pop %v2722
  %v2729 = vmul.f32 1.0, %v2728
  %v2730 = vrcp.pop %v2723
  %v2731 = vmul.f32 1.0, %v2730
  %2733 = vset.pattern.permute.xlu0 0
  %2734 = vperm.xlu0 %2733, %v2725
  %v2735 = vpop.permute.xlu0 %2734
  %2738 = vset.pattern.permute.xlu0 0
  %2739 = vperm.xlu0 %2738, %v2727
  %v2740 = vpop.permute.xlu0 %2739
  %2743 = vset.pattern.permute.xlu0 0
  %2744 = vperm.xlu0 %2743, %v2729
  %v2745 = vpop.permute.xlu0 %2744
  %2748 = vset.pattern.permute.xlu0 0
  %2749 = vperm.xlu0 %2748, %v2731
  %v2750 = vpop.permute.xlu0 %2749
  %v2752 = vmul.f32 %v2423, %v2735
  %v2753 = vmul.f32 %v2424, %v2735
  %v2754 = vmul.f32 %v2427, %v2740
  %v2755 = vmul.f32 %v2428, %v2740
  %v2756 = vmul.f32 %v2431, %v2745
  %v2757 = vmul.f32 %v2432, %v2745
  %v2758 = vmul.f32 %v2435, %v2750
  %v2759 = vmul.f32 %v2436, %v2750
  %v2760 = vadd.f32 %v2752, %v36
  %v2761 = vadd.f32 %v2753, %v37
  %v2762 = vadd.f32 %v2754, %v40
  %v2763 = vadd.f32 %v2755, %v41
  %v2764 = vadd.f32 %v2756, %v44
  %v2765 = vadd.f32 %v2757, %v45
  %v2766 = vadd.f32 %v2758, %v48
  %v2767 = vadd.f32 %v2759, %v49
  %2768 = vst [vmem:[%s10] sm:$0xff] %v2760
  %2769 = vst [vmem:[%s10 + $0x8] sm:$0xff] %v2761
  %2770 = vst [vmem:[%s10 + $0x20] sm:$0xff] %v2762
  %2771 = vst [vmem:[%s10 + $0x28] sm:$0xff] %v2763
  %2772 = vst [vmem:[%s10 + $0x40] sm:$0xff] %v2764
  %2773 = vst [vmem:[%s10 + $0x48] sm:$0xff] %v2765
  %2774 = vst [vmem:[%s10 + $0x60] sm:$0xff] %v2766
  %2775 = vst [vmem:[%s10 + $0x68] sm:$0xff] %v2767
  %2776 = vset.pattern.permute.xlu0 1
  %2777 = vperm.xlu0 %2776, %v2725
  %v2778 = vpop.permute.xlu0 %2777
  %2780 = vset.pattern.permute.xlu0 1
  %2781 = vperm.xlu0 %2780, %v2727
  %v2782 = vpop.permute.xlu0 %2781
  %2784 = vset.pattern.permute.xlu0 1
  %2785 = vperm.xlu0 %2784, %v2729
  %v2786 = vpop.permute.xlu0 %2785
  %2788 = vset.pattern.permute.xlu0 1
  %2789 = vperm.xlu0 %2788, %v2731
  %v2790 = vpop.permute.xlu0 %2789
  %v2792 = vmul.f32 %v2425, %v2778
  %v2793 = vmul.f32 %v2426, %v2778
  %v2794 = vmul.f32 %v2429, %v2782
  %v2795 = vmul.f32 %v2430, %v2782
  %v2796 = vmul.f32 %v2433, %v2786
  %v2797 = vmul.f32 %v2434, %v2786
  %v2798 = vmul.f32 %v2437, %v2790
  %v2799 = vmul.f32 %v2438, %v2790
  %v2800 = vadd.f32 %v2792, %v38
  %v2801 = vadd.f32 %v2793, %v39
  %v2802 = vadd.f32 %v2794, %v42
  %v2803 = vadd.f32 %v2795, %v43
  %v2804 = vadd.f32 %v2796, %v46
  %v2805 = vadd.f32 %v2797, %v47
  %v2806 = vadd.f32 %v2798, %v50
  %v2807 = vadd.f32 %v2799, %v51
  %2808 = vst [vmem:[%s10 + $0x10] sm:$0xff] %v2800
  %2809 = vst [vmem:[%s10 + $0x18] sm:$0xff] %v2801
  %2810 = vst [vmem:[%s10 + $0x30] sm:$0xff] %v2802
  %2811 = vst [vmem:[%s10 + $0x38] sm:$0xff] %v2803
  %2812 = vst [vmem:[%s10 + $0x50] sm:$0xff] %v2804
  %2813 = vst [vmem:[%s10 + $0x58] sm:$0xff] %v2805
  %2814 = vst [vmem:[%s10 + $0x70] sm:$0xff] %v2806
  %2815 = vst [vmem:[%s10 + $0x78] sm:$0xff] %v2807
  // Predicated region
  $region42: #{cab_forward.1} parent=0 // pred_check
    _
  $region43: #{cab_forward.1} parent=0 // pred_check_branch
    %2817 = sbr.rel (0) target = $region45
  $region44: #{cab_forward.1} parent=0 // pred_region
    _
  $region45: #{cab_forward.1} parent=0 // pred_fallthru
    _
  // Predicated region
  $region46: #{cab_forward.1} parent=0 // pred_check
    _
  $region47: #{cab_forward.1} parent=0 // pred_check_branch
    %2819 = sbr.rel (0) target = $region49
  $region48: #{cab_forward.1} parent=0 // pred_region
    _
  $region49: #{cab_forward.1} parent=0 // pred_fallthru
    _

</llo_original>
